<compile_context>
chip_gen: v5e
topology: v5e:2x2
jax: 0.10.0
libtpu: 0.0.40
codegen_flags: <defaults>
</compile_context>

<pallas_src>
import functools

import jax
import jax.numpy as jnp
from jax.experimental import pallas as pl
from jax.experimental.pallas import tpu as pltpu

IN_SIZE = 128
BLOCK_SIZES = [64, 32, 16]
DEPTHS = [2, 2, 2]
PAD = 128              # lane width of every activation / weight tile
HALF_LANES = PAD // 2  # lane offset of the second packed batch row
OUT_WIDTH = BLOCK_SIZES[-1]


def _round_up(x, m):
    return ((x + m - 1) // m) * m


# ---------------------------------------------------------------------------
# Deterministic parameter construction (synthetic weights, no checkpoint).
# Each "linear_bn" is (W, scale, bias) so that
#   y = (x @ W) * scale + bias  ==  BatchNorm1d(Linear(x))  in eval mode.
# ---------------------------------------------------------------------------
def make_params(key):
    keys = iter(jax.random.split(key, 128))

    def linear_bn(kin, kout):
        w = jax.random.normal(next(keys), (kin, kout), jnp.float32) / jnp.sqrt(
            jnp.float32(kin)
        )
        scale = jax.random.uniform(next(keys), (1, kout), jnp.float32, 0.5, 1.5)
        bias = jax.random.normal(next(keys), (1, kout), jnp.float32) * 0.1
        return (w, scale, bias)

    params = {"gate": linear_bn(IN_SIZE, BLOCK_SIZES[0]), "blocks": []}

    layer_io = [(BLOCK_SIZES[0], BLOCK_SIZES[0])] + list(
        zip(BLOCK_SIZES, BLOCK_SIZES[1:])
    )
    for (cin, cout), depth in zip(layer_io, DEPTHS):
        params["blocks"].append(
            {
                "lin1": linear_bn(cin, cout),
                "lin2": linear_bn(cout, cout),
                "shortcut": linear_bn(cin, cout) if cin != cout else None,
            }
        )
        for _ in range(depth - 1):
            params["blocks"].append(
                {
                    "lin1": linear_bn(cout, cout),
                    "lin2": linear_bn(cout, cout),
                    "shortcut": None,
                }
            )
    return params


# ---------------------------------------------------------------------------
# Pack parameters (done ONCE, outside the per-call path):
#   * fold BN scale into W (y = x @ (W*scale) + bias)
#   * batch-pack: weights stored block-diagonally diag(W, W) so two batch rows
#     share one 128-lane row (lane halves [0,64) and [64,128))
#   * transition blocks: lin1 and shortcut fused along N inside each lane half
#       lanes [r0, r0+cout)          -> shortcut output
#       lanes [r0+cout, r0+2*cout)   -> lin1 output
#     and the matching lin2 reads rows [r0+cout, r0+2*cout)
#   * gate: full-width input, weights replicated into each lane half (entries
#     0 and 1) so the gate matmuls produce the packed layout directly.
# Zero-padded rows/cols stay exactly zero through matmul / bias / ReLU.
# ---------------------------------------------------------------------------
def pack_params(params):
    mats, biases, layout = [], [], []

    def new_slot():
        return (jnp.zeros((PAD, PAD), jnp.float32),
                jnp.zeros((1, PAD), jnp.float32))

    def fold(lin):
        w, s, b = lin
        return w * s, b  # exact per-output-column BN scale fold

    # ---- gate: two entries, one per packed batch half ----
    wg, bg = fold(params["gate"])
    kin, kout = wg.shape
    for r0 in (0, HALF_LANES):
        w_p, b_p = new_slot()
        w_p = w_p.at[:kin, r0:r0 + kout].set(wg)
        b_p = b_p.at[:, r0:r0 + kout].set(bg)
        mats.append(w_p)
        biases.append(b_p)

    # ---- residual blocks: two block-diag entries per block ----
    for blk in params["blocks"]:
        w1, b1 = fold(blk["lin1"])
        w2, b2 = fold(blk["lin2"])
        cin, cout = w1.shape
        has_sc = blk["shortcut"] is not None
        if has_sc:
            ws, bs = fold(blk["shortcut"])

        w1_p, b1_p = new_slot()
        w2_p, b2_p = new_slot()
        for r0 in (0, HALF_LANES):
            if has_sc:
                # shortcut result in lanes [r0, r0+cout)
                w1_p = w1_p.at[r0:r0 + cin, r0:r0 + cout].set(ws)
                b1_p = b1_p.at[:, r0:r0 + cout].set(bs)
                # lin1 result in lanes [r0+cout, r0+2*cout)
                w1_p = w1_p.at[r0:r0 + cin, r0 + cout:r0 + 2 * cout].set(w1)
                b1_p = b1_p.at[:, r0 + cout:r0 + 2 * cout].set(b1)
                # lin2 consumes relu(lin1) from lanes [r0+cout, r0+2*cout)
                w2_p = w2_p.at[r0 + cout:r0 + 2 * cout, r0:r0 + cout].set(w2)
                b2_p = b2_p.at[:, r0:r0 + cout].set(b2)
            else:
                w1_p = w1_p.at[r0:r0 + cin, r0:r0 + cout].set(w1)
                b1_p = b1_p.at[:, r0:r0 + cout].set(b1)
                w2_p = w2_p.at[r0:r0 + cout, r0:r0 + cout].set(w2)
                b2_p = b2_p.at[:, r0:r0 + cout].set(b2)
        mats.extend([w1_p, w2_p])
        biases.extend([b1_p, b2_p])
        layout.append((has_sc, int(cout)))

    w_slab = jnp.stack(mats, axis=0).astype(jnp.bfloat16)  # (n_mats, PAD, PAD)
    b_slab = jnp.stack(biases, axis=0)                     # (n_mats, 1, PAD) f32
    return w_slab, b_slab, tuple(layout)


# ---------------------------------------------------------------------------
# Pallas kernel: entire ResNet encoder fused, one batch tile per grid step.
# x_ref: (tile, PAD) bf16   w_ref: (n_mats, PAD, PAD) bf16
# b_ref: (n_mats, 1, PAD) f32   o_ref: (tile//2, PAD) bf16 (batch-packed)
# ---------------------------------------------------------------------------
def resnet_encoder_kernel(layout, half, x_ref, w_ref, b_ref, o_ref):
    def affine(h_bf16, i):
        # bf16 MXU operands, f32 accumulation, f32 bias add (BN folded in).
        return jnp.dot(h_bf16, w_ref[i], preferred_element_type=jnp.float32) + b_ref[i]

    x = x_ref[...]                                          # (tile, PAD) bf16
    # Gate (Linear + folded BN + ReLU) computed per batch half so the result
    # is already batch-packed: rows j / j+half share lanes [0,64) / [64,128).
    h_top = jnp.maximum(affine(x[:half], 0), 0.0)           # (half, PAD) f32
    h_bot = jnp.maximum(affine(x[half:], 1), 0.0)
    hp = h_top + h_bot                                      # disjoint lane halves

    lane = jax.lax.broadcasted_iota(jnp.int32, (half, PAD), 1) % HALF_LANES

    i = 2
    for has_shortcut, cout in layout:
        hp_lo = hp.astype(jnp.bfloat16)
        z = affine(hp_lo, i)                                 # lin1 (+fused shortcut)
        y = affine(jnp.maximum(z, 0.0).astype(jnp.bfloat16), i + 1)   # lin2 + BN
        if has_shortcut:
            # Shortcut output already sits in lanes [0,cout) / [64,64+cout).
            residual = jnp.where(lane < cout, z, 0.0)
        else:
            residual = hp
        # Reference ResidualBlock: no activation after the residual add.
        hp = y + residual
        i += 2

    o_ref[...] = hp.astype(o_ref.dtype)


# ---------------------------------------------------------------------------
# Wrapper.  emb_tables should be pre-cast to bf16; (w_slab, b_slab, layout)
# come from pack_params() — both prepared once, outside the per-call path.
# ---------------------------------------------------------------------------
def single_encoder(indexes, emb_tables, w_slab, b_slab, layout, *, batch_tile=None):
    for t in emb_tables:
        assert t.shape[1] == IN_SIZE, "'stack' embedding requires dim == in_size"

    # Embedding (type 'stack'): sum of per-column lookups.  allow_input_fusion
    # lets XLA fuse the gather + sum + cast directly into the pallas_call input.
    x = emb_tables[0][indexes[:, 0]].astype(jnp.float32)
    for i in range(1, len(emb_tables)):
        x = x + emb_tables[i][indexes[:, i]].astype(jnp.float32)
    x = x.astype(jnp.bfloat16)

    batch = x.shape[0]
    if batch_tile is None:
        batch_tile = min(1024, _round_up(batch, 32))
        if batch >= 64:
            # Keep >=2 grid steps so the 'parallel' batch axis can be sharded
            # across both TensorCores on v7x.
            batch_tile = min(batch_tile, _round_up((batch + 1) // 2, 32))
    batch_tile = max(32, _round_up(batch_tile, 32))
    padded = _round_up(batch, batch_tile)
    if padded != batch:
        x = jnp.pad(x, ((0, padded - batch), (0, 0)))

    n_mats = w_slab.shape[0]
    half = batch_tile // 2
    n_tiles = padded // batch_tile

    cost = pl.CostEstimate(
        flops=2 * padded * PAD * PAD                         # gate (two halves)
        + 2 * (padded // 2) * (n_mats - 2) * PAD * PAD,      # batch-packed blocks
        transcendentals=0,
        bytes_accessed=padded * PAD * 2 * (1 + len(emb_tables))  # gathers + x
        + (padded // 2) * PAD * 2                                # packed bf16 out
        + w_slab.size * 2
        + b_slab.size * 4,
    )

    kernel = functools.partial(resnet_encoder_kernel, layout, half)
    out = pl.pallas_call(
        kernel,
        out_shape=jax.ShapeDtypeStruct((padded // 2, PAD), jnp.bfloat16),
        grid_spec=pltpu.PrefetchScalarGridSpec(
            num_scalar_prefetch=0,
            grid=(n_tiles,),
            in_specs=[
                pl.BlockSpec((batch_tile, PAD), lambda i: (i, 0)),
                # Constant index maps: slabs are DMA'd once and stay resident
                # in VMEM across grid steps (no per-step refetch).
                pl.BlockSpec(w_slab.shape, lambda i: (0, 0, 0)),
                pl.BlockSpec(b_slab.shape, lambda i: (0, 0, 0)),
            ],
            out_specs=pl.BlockSpec((half, PAD), lambda i: (i, 0)),
        ),
        compiler_params=pltpu.CompilerParams(
            dimension_semantics=("parallel",),
            allow_input_fusion=[True, False, False],
        ),
        cost_estimate=cost,
    )(x, w_slab, b_slab)

    # Un-pack: packed row j of tile g holds original rows g*T+j (lanes [0,16))
    # and g*T+half+j (lanes [64,80)).
    o = out.reshape(n_tiles, half, PAD)
    o = jnp.concatenate(
        [o[:, :, :OUT_WIDTH], o[:, :, HALF_LANES:HALF_LANES + OUT_WIDTH]], axis=1
    )
    return o.reshape(padded, OUT_WIDTH)[:batch].astype(jnp.float32)


if __name__ == "__main__":
    key = jax.random.PRNGKey(0)
    k_emb, k_par, k_idx = jax.random.split(key, 3)

    # 'stack' embedding: all dims must be equal (and must equal in_size=128).
    embedding_nums = [100, 50]
    embedding_dims = [IN_SIZE, IN_SIZE]

    ek = jax.random.split(k_emb, len(embedding_nums))
    # Tables pre-cast to bf16 once so every gather reads half the bytes.
    emb_tables = [
        (jax.random.normal(ek[i], (n, d), jnp.float32) * 0.1).astype(jnp.bfloat16)
        for i, (n, d) in enumerate(zip(embedding_nums, embedding_dims))
    ]

    params = make_params(k_par)
    # Parameter packing (BN fold, block-diag batch packing, bf16 cast) done once.
    w_slab, b_slab, layout = pack_params(params)

    B = 64
    cols = [
        jax.random.randint(jax.random.fold_in(k_idx, i), (B,), 0, n, dtype=jnp.int32)
        for i, n in enumerate(embedding_nums)
    ]
    indexes = jnp.stack(cols, axis=1)  # (B, num_embedding_fields) int32

    out = single_encoder(indexes, emb_tables, w_slab, b_slab, layout)
    jax.block_until_ready(out)
    assert out.shape == (B, OUT_WIDTH) and out.dtype == jnp.float32
    print("KERNEL_OK")
</pallas_src>

<mosaic_0001>
module attributes {stable_mosaic.version = 11 : i64} {
  func.func @resnet_encoder_kernel(%arg0: i32, %arg1: memref<32x128xbf16, #tpu.memory_space<vmem>>, %arg2: memref<14x128x128xbf16, #tpu.memory_space<vmem>>, %arg3: memref<14x1x128xf32, #tpu.memory_space<vmem>>, %arg4: memref<16x128xbf16, #tpu.memory_space<vmem>>) attributes {dimension_semantics = [#tpu.dimension_semantics<parallel>], iteration_bounds = array<i64: 2>, scalar_prefetch = 0 : i64, scratch_operands = 0 : i64, tpu.core_type = #tpu.core_type<tc>, window_params = [{transform_indices = @transform_0, window_bounds = array<i64: 32, 128>}, {pipeline_mode = #tpu.pipeline_mode<synchronous>, transform_indices = @transform_1, window_bounds = array<i64: 14, 128, 128>}, {pipeline_mode = #tpu.pipeline_mode<synchronous>, transform_indices = @transform_2, window_bounds = array<i64: 14, 1, 128>}, {transform_indices = @transform_3, window_bounds = array<i64: 16, 128>}]} {
    %c0 = arith.constant 0 : index
    %c0_0 = arith.constant 0 : index
    %0 = vector.load %arg1[%c0, %c0_0] : memref<32x128xbf16, #tpu.memory_space<vmem>>, vector<32x128xbf16>
    %1 = vector.extract_strided_slice %0 {offsets = [0, 0], sizes = [16, 128], strides = [1, 1]} : vector<32x128xbf16> to vector<16x128xbf16>
    %c0_1 = arith.constant 0 : index
    %c0_2 = arith.constant 0 : index
    %c0_3 = arith.constant 0 : index
    %2 = vector.load %arg2[%c0_1, %c0_2, %c0_3] : memref<14x128x128xbf16, #tpu.memory_space<vmem>>, vector<1x128x128xbf16>
    %3 = vector.shape_cast %2 : vector<1x128x128xbf16> to vector<128x128xbf16>
    %cst = arith.constant dense<0.000000e+00> : vector<16x128xf32>
    %4 = tpu.matmul %1, %3, %cst {dimension_numbers = #tpu.dot_dimension_numbers<[1], [0], [0], [1], [0, 0, 1, 1], [], []>} : vector<16x128xbf16>, vector<128x128xbf16>, vector<16x128xf32> -> vector<16x128xf32>
    %c0_4 = arith.constant 0 : index
    %c0_5 = arith.constant 0 : index
    %c0_6 = arith.constant 0 : index
    %5 = vector.load %arg3[%c0_4, %c0_5, %c0_6] : memref<14x1x128xf32, #tpu.memory_space<vmem>>, vector<1x1x128xf32>
    %6 = vector.shape_cast %5 : vector<1x1x128xf32> to vector<1x128xf32>
    %7 = vector.broadcast %6 : vector<1x128xf32> to vector<16x128xf32>
    %8 = arith.addf %4, %7 : vector<16x128xf32>
    %cst_7 = arith.constant 0.000000e+00 : f32
    %9 = vector.broadcast %cst_7 : f32 to vector<16x128xf32>
    %10 = arith.maximumf %8, %9 : vector<16x128xf32>
    %11 = vector.extract_strided_slice %0 {offsets = [16, 0], sizes = [16, 128], strides = [1, 1]} : vector<32x128xbf16> to vector<16x128xbf16>
    %c1 = arith.constant 1 : index
    %c0_8 = arith.constant 0 : index
    %c0_9 = arith.constant 0 : index
    %12 = vector.load %arg2[%c1, %c0_8, %c0_9] : memref<14x128x128xbf16, #tpu.memory_space<vmem>>, vector<1x128x128xbf16>
    %13 = vector.shape_cast %12 : vector<1x128x128xbf16> to vector<128x128xbf16>
    %cst_10 = arith.constant dense<0.000000e+00> : vector<16x128xf32>
    %14 = tpu.matmul %11, %13, %cst_10 {dimension_numbers = #tpu.dot_dimension_numbers<[1], [0], [0], [1], [0, 0, 1, 1], [], []>} : vector<16x128xbf16>, vector<128x128xbf16>, vector<16x128xf32> -> vector<16x128xf32>
    %c1_11 = arith.constant 1 : index
    %c0_12 = arith.constant 0 : index
    %c0_13 = arith.constant 0 : index
    %15 = vector.load %arg3[%c1_11, %c0_12, %c0_13] : memref<14x1x128xf32, #tpu.memory_space<vmem>>, vector<1x1x128xf32>
    %16 = vector.shape_cast %15 : vector<1x1x128xf32> to vector<1x128xf32>
    %17 = vector.broadcast %16 : vector<1x128xf32> to vector<16x128xf32>
    %18 = arith.addf %14, %17 : vector<16x128xf32>
    %cst_14 = arith.constant 0.000000e+00 : f32
    %19 = vector.broadcast %cst_14 : f32 to vector<16x128xf32>
    %20 = arith.maximumf %18, %19 : vector<16x128xf32>
    %21 = arith.addf %10, %20 : vector<16x128xf32>
    %22 = tpu.iota {dimensions = array<i32: 1>} : vector<16x128xi32>
    %c64_i32 = arith.constant 64 : i32
    %c0_i32 = arith.constant 0 : i32
    %23 = arith.cmpi eq, %c64_i32, %c0_i32 : i32
    %c1_i32 = arith.constant 1 : i32
    %24 = arith.select %23, %c1_i32, %c64_i32 : i32
    %25 = vector.broadcast %24 : i32 to vector<16x128xi32>
    %26 = arith.remsi %22, %25 : vector<16x128xi32>
    %c0_i32_15 = arith.constant 0 : i32
    %27 = vector.broadcast %c0_i32_15 : i32 to vector<16x128xi32>
    %28 = arith.cmpi ne, %26, %27 : vector<16x128xi32>
    %c0_i32_16 = arith.constant 0 : i32
    %29 = vector.broadcast %c0_i32_16 : i32 to vector<16x128xi32>
    %30 = arith.cmpi slt, %26, %29 : vector<16x128xi32>
    %c0_i32_17 = arith.constant 0 : i32
    %31 = arith.cmpi slt, %24, %c0_i32_17 : i32
    %32 = vector.broadcast %31 : i1 to vector<16x128xi1>
    %33 = vector.broadcast %32 : vector<16x128xi1> to vector<16x128xi1>
    %34 = arith.xori %30, %33 : vector<16x128xi1>
    %35 = arith.andi %34, %28 : vector<16x128xi1>
    %36 = vector.broadcast %24 : i32 to vector<16x128xi32>
    %37 = arith.addi %26, %36 : vector<16x128xi32>
    %38 = arith.select %35, %37, %26 : vector<16x128xi1>, vector<16x128xi32>
    %39 = arith.truncf %21 : vector<16x128xf32> to vector<16x128xbf16>
    %c2 = arith.constant 2 : index
    %c0_18 = arith.constant 0 : index
    %c0_19 = arith.constant 0 : index
    %40 = vector.load %arg2[%c2, %c0_18, %c0_19] : memref<14x128x128xbf16, #tpu.memory_space<vmem>>, vector<1x128x128xbf16>
    %41 = vector.shape_cast %40 : vector<1x128x128xbf16> to vector<128x128xbf16>
    %cst_20 = arith.constant dense<0.000000e+00> : vector<16x128xf32>
    %42 = tpu.matmul %39, %41, %cst_20 {dimension_numbers = #tpu.dot_dimension_numbers<[1], [0], [0], [1], [0, 0, 1, 1], [], []>} : vector<16x128xbf16>, vector<128x128xbf16>, vector<16x128xf32> -> vector<16x128xf32>
    %c2_21 = arith.constant 2 : index
    %c0_22 = arith.constant 0 : index
    %c0_23 = arith.constant 0 : index
    %43 = vector.load %arg3[%c2_21, %c0_22, %c0_23] : memref<14x1x128xf32, #tpu.memory_space<vmem>>, vector<1x1x128xf32>
    %44 = vector.shape_cast %43 : vector<1x1x128xf32> to vector<1x128xf32>
    %45 = vector.broadcast %44 : vector<1x128xf32> to vector<16x128xf32>
    %46 = arith.addf %42, %45 : vector<16x128xf32>
    %cst_24 = arith.constant 0.000000e+00 : f32
    %47 = vector.broadcast %cst_24 : f32 to vector<16x128xf32>
    %48 = arith.maximumf %46, %47 : vector<16x128xf32>
    %49 = arith.truncf %48 : vector<16x128xf32> to vector<16x128xbf16>
    %c3 = arith.constant 3 : index
    %c0_25 = arith.constant 0 : index
    %c0_26 = arith.constant 0 : index
    %50 = vector.load %arg2[%c3, %c0_25, %c0_26] : memref<14x128x128xbf16, #tpu.memory_space<vmem>>, vector<1x128x128xbf16>
    %51 = vector.shape_cast %50 : vector<1x128x128xbf16> to vector<128x128xbf16>
    %cst_27 = arith.constant dense<0.000000e+00> : vector<16x128xf32>
    %52 = tpu.matmul %49, %51, %cst_27 {dimension_numbers = #tpu.dot_dimension_numbers<[1], [0], [0], [1], [0, 0, 1, 1], [], []>} : vector<16x128xbf16>, vector<128x128xbf16>, vector<16x128xf32> -> vector<16x128xf32>
    %c3_28 = arith.constant 3 : index
    %c0_29 = arith.constant 0 : index
    %c0_30 = arith.constant 0 : index
    %53 = vector.load %arg3[%c3_28, %c0_29, %c0_30] : memref<14x1x128xf32, #tpu.memory_space<vmem>>, vector<1x1x128xf32>
    %54 = vector.shape_cast %53 : vector<1x1x128xf32> to vector<1x128xf32>
    %55 = vector.broadcast %54 : vector<1x128xf32> to vector<16x128xf32>
    %56 = arith.addf %52, %55 : vector<16x128xf32>
    %57 = arith.addf %56, %21 : vector<16x128xf32>
    %58 = arith.truncf %57 : vector<16x128xf32> to vector<16x128xbf16>
    %c4 = arith.constant 4 : index
    %c0_31 = arith.constant 0 : index
    %c0_32 = arith.constant 0 : index
    %59 = vector.load %arg2[%c4, %c0_31, %c0_32] : memref<14x128x128xbf16, #tpu.memory_space<vmem>>, vector<1x128x128xbf16>
    %60 = vector.shape_cast %59 : vector<1x128x128xbf16> to vector<128x128xbf16>
    %cst_33 = arith.constant dense<0.000000e+00> : vector<16x128xf32>
    %61 = tpu.matmul %58, %60, %cst_33 {dimension_numbers = #tpu.dot_dimension_numbers<[1], [0], [0], [1], [0, 0, 1, 1], [], []>} : vector<16x128xbf16>, vector<128x128xbf16>, vector<16x128xf32> -> vector<16x128xf32>
    %c4_34 = arith.constant 4 : index
    %c0_35 = arith.constant 0 : index
    %c0_36 = arith.constant 0 : index
    %62 = vector.load %arg3[%c4_34, %c0_35, %c0_36] : memref<14x1x128xf32, #tpu.memory_space<vmem>>, vector<1x1x128xf32>
    %63 = vector.shape_cast %62 : vector<1x1x128xf32> to vector<1x128xf32>
    %64 = vector.broadcast %63 : vector<1x128xf32> to vector<16x128xf32>
    %65 = arith.addf %61, %64 : vector<16x128xf32>
    %cst_37 = arith.constant 0.000000e+00 : f32
    %66 = vector.broadcast %cst_37 : f32 to vector<16x128xf32>
    %67 = arith.maximumf %65, %66 : vector<16x128xf32>
    %68 = arith.truncf %67 : vector<16x128xf32> to vector<16x128xbf16>
    %c5 = arith.constant 5 : index
    %c0_38 = arith.constant 0 : index
    %c0_39 = arith.constant 0 : index
    %69 = vector.load %arg2[%c5, %c0_38, %c0_39] : memref<14x128x128xbf16, #tpu.memory_space<vmem>>, vector<1x128x128xbf16>
    %70 = vector.shape_cast %69 : vector<1x128x128xbf16> to vector<128x128xbf16>
    %cst_40 = arith.constant dense<0.000000e+00> : vector<16x128xf32>
    %71 = tpu.matmul %68, %70, %cst_40 {dimension_numbers = #tpu.dot_dimension_numbers<[1], [0], [0], [1], [0, 0, 1, 1], [], []>} : vector<16x128xbf16>, vector<128x128xbf16>, vector<16x128xf32> -> vector<16x128xf32>
    %c5_41 = arith.constant 5 : index
    %c0_42 = arith.constant 0 : index
    %c0_43 = arith.constant 0 : index
    %72 = vector.load %arg3[%c5_41, %c0_42, %c0_43] : memref<14x1x128xf32, #tpu.memory_space<vmem>>, vector<1x1x128xf32>
    %73 = vector.shape_cast %72 : vector<1x1x128xf32> to vector<1x128xf32>
    %74 = vector.broadcast %73 : vector<1x128xf32> to vector<16x128xf32>
    %75 = arith.addf %71, %74 : vector<16x128xf32>
    %76 = arith.addf %75, %57 : vector<16x128xf32>
    %77 = arith.truncf %76 : vector<16x128xf32> to vector<16x128xbf16>
    %c6 = arith.constant 6 : index
    %c0_44 = arith.constant 0 : index
    %c0_45 = arith.constant 0 : index
    %78 = vector.load %arg2[%c6, %c0_44, %c0_45] : memref<14x128x128xbf16, #tpu.memory_space<vmem>>, vector<1x128x128xbf16>
    %79 = vector.shape_cast %78 : vector<1x128x128xbf16> to vector<128x128xbf16>
    %cst_46 = arith.constant dense<0.000000e+00> : vector<16x128xf32>
    %80 = tpu.matmul %77, %79, %cst_46 {dimension_numbers = #tpu.dot_dimension_numbers<[1], [0], [0], [1], [0, 0, 1, 1], [], []>} : vector<16x128xbf16>, vector<128x128xbf16>, vector<16x128xf32> -> vector<16x128xf32>
    %c6_47 = arith.constant 6 : index
    %c0_48 = arith.constant 0 : index
    %c0_49 = arith.constant 0 : index
    %81 = vector.load %arg3[%c6_47, %c0_48, %c0_49] : memref<14x1x128xf32, #tpu.memory_space<vmem>>, vector<1x1x128xf32>
    %82 = vector.shape_cast %81 : vector<1x1x128xf32> to vector<1x128xf32>
    %83 = vector.broadcast %82 : vector<1x128xf32> to vector<16x128xf32>
    %84 = arith.addf %80, %83 : vector<16x128xf32>
    %cst_50 = arith.constant 0.000000e+00 : f32
    %85 = vector.broadcast %cst_50 : f32 to vector<16x128xf32>
    %86 = arith.maximumf %84, %85 : vector<16x128xf32>
    %87 = arith.truncf %86 : vector<16x128xf32> to vector<16x128xbf16>
    %c7 = arith.constant 7 : index
    %c0_51 = arith.constant 0 : index
    %c0_52 = arith.constant 0 : index
    %88 = vector.load %arg2[%c7, %c0_51, %c0_52] : memref<14x128x128xbf16, #tpu.memory_space<vmem>>, vector<1x128x128xbf16>
    %89 = vector.shape_cast %88 : vector<1x128x128xbf16> to vector<128x128xbf16>
    %cst_53 = arith.constant dense<0.000000e+00> : vector<16x128xf32>
    %90 = tpu.matmul %87, %89, %cst_53 {dimension_numbers = #tpu.dot_dimension_numbers<[1], [0], [0], [1], [0, 0, 1, 1], [], []>} : vector<16x128xbf16>, vector<128x128xbf16>, vector<16x128xf32> -> vector<16x128xf32>
    %c7_54 = arith.constant 7 : index
    %c0_55 = arith.constant 0 : index
    %c0_56 = arith.constant 0 : index
    %91 = vector.load %arg3[%c7_54, %c0_55, %c0_56] : memref<14x1x128xf32, #tpu.memory_space<vmem>>, vector<1x1x128xf32>
    %92 = vector.shape_cast %91 : vector<1x1x128xf32> to vector<1x128xf32>
    %93 = vector.broadcast %92 : vector<1x128xf32> to vector<16x128xf32>
    %94 = arith.addf %90, %93 : vector<16x128xf32>
    %c32_i32 = arith.constant 32 : i32
    %95 = vector.broadcast %c32_i32 : i32 to vector<16x128xi32>
    %96 = arith.cmpi slt, %38, %95 : vector<16x128xi32>
    %cst_57 = arith.constant 0.000000e+00 : f32
    %97 = vector.broadcast %cst_57 : f32 to vector<16x128xf32>
    %98 = arith.select %96, %84, %97 : vector<16x128xi1>, vector<16x128xf32>
    %99 = arith.addf %94, %98 : vector<16x128xf32>
    %100 = arith.truncf %99 : vector<16x128xf32> to vector<16x128xbf16>
    %c8 = arith.constant 8 : index
    %c0_58 = arith.constant 0 : index
    %c0_59 = arith.constant 0 : index
    %101 = vector.load %arg2[%c8, %c0_58, %c0_59] : memref<14x128x128xbf16, #tpu.memory_space<vmem>>, vector<1x128x128xbf16>
    %102 = vector.shape_cast %101 : vector<1x128x128xbf16> to vector<128x128xbf16>
    %cst_60 = arith.constant dense<0.000000e+00> : vector<16x128xf32>
    %103 = tpu.matmul %100, %102, %cst_60 {dimension_numbers = #tpu.dot_dimension_numbers<[1], [0], [0], [1], [0, 0, 1, 1], [], []>} : vector<16x128xbf16>, vector<128x128xbf16>, vector<16x128xf32> -> vector<16x128xf32>
    %c8_61 = arith.constant 8 : index
    %c0_62 = arith.constant 0 : index
    %c0_63 = arith.constant 0 : index
    %104 = vector.load %arg3[%c8_61, %c0_62, %c0_63] : memref<14x1x128xf32, #tpu.memory_space<vmem>>, vector<1x1x128xf32>
    %105 = vector.shape_cast %104 : vector<1x1x128xf32> to vector<1x128xf32>
    %106 = vector.broadcast %105 : vector<1x128xf32> to vector<16x128xf32>
    %107 = arith.addf %103, %106 : vector<16x128xf32>
    %cst_64 = arith.constant 0.000000e+00 : f32
    %108 = vector.broadcast %cst_64 : f32 to vector<16x128xf32>
    %109 = arith.maximumf %107, %108 : vector<16x128xf32>
    %110 = arith.truncf %109 : vector<16x128xf32> to vector<16x128xbf16>
    %c9 = arith.constant 9 : index
    %c0_65 = arith.constant 0 : index
    %c0_66 = arith.constant 0 : index
    %111 = vector.load %arg2[%c9, %c0_65, %c0_66] : memref<14x128x128xbf16, #tpu.memory_space<vmem>>, vector<1x128x128xbf16>
    %112 = vector.shape_cast %111 : vector<1x128x128xbf16> to vector<128x128xbf16>
    %cst_67 = arith.constant dense<0.000000e+00> : vector<16x128xf32>
    %113 = tpu.matmul %110, %112, %cst_67 {dimension_numbers = #tpu.dot_dimension_numbers<[1], [0], [0], [1], [0, 0, 1, 1], [], []>} : vector<16x128xbf16>, vector<128x128xbf16>, vector<16x128xf32> -> vector<16x128xf32>
    %c9_68 = arith.constant 9 : index
    %c0_69 = arith.constant 0 : index
    %c0_70 = arith.constant 0 : index
    %114 = vector.load %arg3[%c9_68, %c0_69, %c0_70] : memref<14x1x128xf32, #tpu.memory_space<vmem>>, vector<1x1x128xf32>
    %115 = vector.shape_cast %114 : vector<1x1x128xf32> to vector<1x128xf32>
    %116 = vector.broadcast %115 : vector<1x128xf32> to vector<16x128xf32>
    %117 = arith.addf %113, %116 : vector<16x128xf32>
    %118 = arith.addf %117, %99 : vector<16x128xf32>
    %119 = arith.truncf %118 : vector<16x128xf32> to vector<16x128xbf16>
    %c10 = arith.constant 10 : index
    %c0_71 = arith.constant 0 : index
    %c0_72 = arith.constant 0 : index
    %120 = vector.load %arg2[%c10, %c0_71, %c0_72] : memref<14x128x128xbf16, #tpu.memory_space<vmem>>, vector<1x128x128xbf16>
    %121 = vector.shape_cast %120 : vector<1x128x128xbf16> to vector<128x128xbf16>
    %cst_73 = arith.constant dense<0.000000e+00> : vector<16x128xf32>
    %122 = tpu.matmul %119, %121, %cst_73 {dimension_numbers = #tpu.dot_dimension_numbers<[1], [0], [0], [1], [0, 0, 1, 1], [], []>} : vector<16x128xbf16>, vector<128x128xbf16>, vector<16x128xf32> -> vector<16x128xf32>
    %c10_74 = arith.constant 10 : index
    %c0_75 = arith.constant 0 : index
    %c0_76 = arith.constant 0 : index
    %123 = vector.load %arg3[%c10_74, %c0_75, %c0_76] : memref<14x1x128xf32, #tpu.memory_space<vmem>>, vector<1x1x128xf32>
    %124 = vector.shape_cast %123 : vector<1x1x128xf32> to vector<1x128xf32>
    %125 = vector.broadcast %124 : vector<1x128xf32> to vector<16x128xf32>
    %126 = arith.addf %122, %125 : vector<16x128xf32>
    %cst_77 = arith.constant 0.000000e+00 : f32
    %127 = vector.broadcast %cst_77 : f32 to vector<16x128xf32>
    %128 = arith.maximumf %126, %127 : vector<16x128xf32>
    %129 = arith.truncf %128 : vector<16x128xf32> to vector<16x128xbf16>
    %c11 = arith.constant 11 : index
    %c0_78 = arith.constant 0 : index
    %c0_79 = arith.constant 0 : index
    %130 = vector.load %arg2[%c11, %c0_78, %c0_79] : memref<14x128x128xbf16, #tpu.memory_space<vmem>>, vector<1x128x128xbf16>
    %131 = vector.shape_cast %130 : vector<1x128x128xbf16> to vector<128x128xbf16>
    %cst_80 = arith.constant dense<0.000000e+00> : vector<16x128xf32>
    %132 = tpu.matmul %129, %131, %cst_80 {dimension_numbers = #tpu.dot_dimension_numbers<[1], [0], [0], [1], [0, 0, 1, 1], [], []>} : vector<16x128xbf16>, vector<128x128xbf16>, vector<16x128xf32> -> vector<16x128xf32>
    %c11_81 = arith.constant 11 : index
    %c0_82 = arith.constant 0 : index
    %c0_83 = arith.constant 0 : index
    %133 = vector.load %arg3[%c11_81, %c0_82, %c0_83] : memref<14x1x128xf32, #tpu.memory_space<vmem>>, vector<1x1x128xf32>
    %134 = vector.shape_cast %133 : vector<1x1x128xf32> to vector<1x128xf32>
    %135 = vector.broadcast %134 : vector<1x128xf32> to vector<16x128xf32>
    %136 = arith.addf %132, %135 : vector<16x128xf32>
    %c16_i32 = arith.constant 16 : i32
    %137 = vector.broadcast %c16_i32 : i32 to vector<16x128xi32>
    %138 = arith.cmpi slt, %38, %137 : vector<16x128xi32>
    %cst_84 = arith.constant 0.000000e+00 : f32
    %139 = vector.broadcast %cst_84 : f32 to vector<16x128xf32>
    %140 = arith.select %138, %126, %139 : vector<16x128xi1>, vector<16x128xf32>
    %141 = arith.addf %136, %140 : vector<16x128xf32>
    %142 = arith.truncf %141 : vector<16x128xf32> to vector<16x128xbf16>
    %c12 = arith.constant 12 : index
    %c0_85 = arith.constant 0 : index
    %c0_86 = arith.constant 0 : index
    %143 = vector.load %arg2[%c12, %c0_85, %c0_86] : memref<14x128x128xbf16, #tpu.memory_space<vmem>>, vector<1x128x128xbf16>
    %144 = vector.shape_cast %143 : vector<1x128x128xbf16> to vector<128x128xbf16>
    %cst_87 = arith.constant dense<0.000000e+00> : vector<16x128xf32>
    %145 = tpu.matmul %142, %144, %cst_87 {dimension_numbers = #tpu.dot_dimension_numbers<[1], [0], [0], [1], [0, 0, 1, 1], [], []>} : vector<16x128xbf16>, vector<128x128xbf16>, vector<16x128xf32> -> vector<16x128xf32>
    %c12_88 = arith.constant 12 : index
    %c0_89 = arith.constant 0 : index
    %c0_90 = arith.constant 0 : index
    %146 = vector.load %arg3[%c12_88, %c0_89, %c0_90] : memref<14x1x128xf32, #tpu.memory_space<vmem>>, vector<1x1x128xf32>
    %147 = vector.shape_cast %146 : vector<1x1x128xf32> to vector<1x128xf32>
    %148 = vector.broadcast %147 : vector<1x128xf32> to vector<16x128xf32>
    %149 = arith.addf %145, %148 : vector<16x128xf32>
    %cst_91 = arith.constant 0.000000e+00 : f32
    %150 = vector.broadcast %cst_91 : f32 to vector<16x128xf32>
    %151 = arith.maximumf %149, %150 : vector<16x128xf32>
    %152 = arith.truncf %151 : vector<16x128xf32> to vector<16x128xbf16>
    %c13 = arith.constant 13 : index
    %c0_92 = arith.constant 0 : index
    %c0_93 = arith.constant 0 : index
    %153 = vector.load %arg2[%c13, %c0_92, %c0_93] : memref<14x128x128xbf16, #tpu.memory_space<vmem>>, vector<1x128x128xbf16>
    %154 = vector.shape_cast %153 : vector<1x128x128xbf16> to vector<128x128xbf16>
    %cst_94 = arith.constant dense<0.000000e+00> : vector<16x128xf32>
    %155 = tpu.matmul %152, %154, %cst_94 {dimension_numbers = #tpu.dot_dimension_numbers<[1], [0], [0], [1], [0, 0, 1, 1], [], []>} : vector<16x128xbf16>, vector<128x128xbf16>, vector<16x128xf32> -> vector<16x128xf32>
    %c13_95 = arith.constant 13 : index
    %c0_96 = arith.constant 0 : index
    %c0_97 = arith.constant 0 : index
    %156 = vector.load %arg3[%c13_95, %c0_96, %c0_97] : memref<14x1x128xf32, #tpu.memory_space<vmem>>, vector<1x1x128xf32>
    %157 = vector.shape_cast %156 : vector<1x1x128xf32> to vector<1x128xf32>
    %158 = vector.broadcast %157 : vector<1x128xf32> to vector<16x128xf32>
    %159 = arith.addf %155, %158 : vector<16x128xf32>
    %160 = arith.addf %159, %141 : vector<16x128xf32>
    %161 = arith.truncf %160 : vector<16x128xf32> to vector<16x128xbf16>
    %c0_98 = arith.constant 0 : index
    %c0_99 = arith.constant 0 : index
    %162 = vector.load %arg4[%c0_98, %c0_99] : memref<16x128xbf16, #tpu.memory_space<vmem>>, vector<16x128xbf16>
    tpu.vector_store %arg4[%c0_98, %c0_99], %161 {strides = array<i32>} : memref<16x128xbf16, #tpu.memory_space<vmem>>, vector<16x128xbf16>,
    return
  }
  func.func @transform_0(%arg0: i32) -> (i32, i32) {
    %c0_i32 = arith.constant 0 : i32
    %c0_i32_0 = arith.constant 0 : i32
    return %arg0, %c0_i32 : i32, i32
  }
  func.func @transform_1(%arg0: i32) -> (i32, i32, i32) {
    %c0_i32 = arith.constant 0 : i32
    %c0_i32_0 = arith.constant 0 : i32
    %c0_i32_1 = arith.constant 0 : i32
    %c0_i32_2 = arith.constant 0 : i32
    return %c0_i32, %c0_i32_0, %c0_i32_1 : i32, i32, i32
  }
  func.func @transform_2(%arg0: i32) -> (i32, i32, i32) {
    %c0_i32 = arith.constant 0 : i32
    %c0_i32_0 = arith.constant 0 : i32
    %c0_i32_1 = arith.constant 0 : i32
    %c0_i32_2 = arith.constant 0 : i32
    return %c0_i32, %c0_i32_0, %c0_i32_1 : i32, i32, i32
  }
  func.func @transform_3(%arg0: i32) -> (i32, i32) {
    %c0_i32 = arith.constant 0 : i32
    %c0_i32_0 = arith.constant 0 : i32
    return %arg0, %c0_i32 : i32, i32
  }
}

</mosaic_0001>

<llo_original>
// kernel: tpu_custom_call.1
$region0: #{tpu_custom_call.1}
  #allocation0 [shape = 'u32[]', space=smem, size = 0x4, offset = 0x4, fixed_abs, tag = 'smem constant byte address 0x4 - core index']
  #allocation1 [shape = 'u32[72,128]{1,0:T(1,128)}', space=vmem, size = 0x9000, scoped, tag = 'internal scratch']
  %s0 = inlined_call_operand.hbm [shape: bf16[64,128], index: 0, kind: input, shape index: {}]
  %s1 = inlined_call_operand.hbm [shape: bf16[14,128,128], index: 1, kind: input, shape index: {}]
  %s2 = inlined_call_operand.hbm [shape: f32[14,1,128], index: 2, kind: input, shape index: {}]
  %s3 = inlined_call_operand.hbm [shape: bf16[32,128], index: 3, kind: output, shape index: {}]
  %s4 = sld [smem:[#allocation0]]
  $region57: #{tpu_custom_call.1} parent=0
    _
  %s6 = ssub.s32 1, %s4
  %s7 = scalar_select 0, %s6, %s4
  $region1: #{tpu_custom_call.1} parent=0
    #allocation2 [shape = 'u8[16384]{0}', space=vmem, size = 0x4000, scoped, tag = 'input window, operand 0']
    #allocation3 [shape = 's32[2]{0}', space=sflag, size = 0x8, scoped, tag = 'scoped memory for tpu_custom_call.1']
    #allocation4 [shape = 's32[2]{0}', space=sflag, size = 0x8, scoped, tag = 'scoped memory for tpu_custom_call.1']
    #allocation5 [shape = 'u8[458752]{0}', space=vmem, size = 0x70000, scoped, tag = 'input window, operand 1, single buffered']
    #allocation6 [shape = 's32[1]{0}', space=sflag, size = 0x4, scoped, tag = 'scoped memory for tpu_custom_call.1']
    #allocation7 [shape = 'u8[7168]{0}', space=vmem, size = 0x1c00, scoped, tag = 'input window, operand 2, single buffered']
    #allocation8 [shape = 'u8[8192]{0}', space=vmem, size = 0x2000, scoped, tag = 'output window, operand 0']
    %8 = vsyncpa [#allocation3], 0
    %s9 = scalar_lea.sflag [#allocation3], 1
    %10 = vsyncpa %s9, 0
    %11 = vsyncpa [#allocation6], 0
    %12 = vsyncpa [#allocation4], 0
    %s13 = scalar_lea.sflag [#allocation4], 1
    %14 = vsyncpa %s13, 0
    loop: start=0, step=1, limit=4
    $region2: #{tpu_custom_call.1} parent=1 // loop_pre_header
      _
    $region3: #{tpu_custom_call.1} parent=1 // loop_header
      %s16 = sphi 0, %s20
      %p17 = scmp.ge.s32.totalorder %s16, 4
      %s26 = sphi 0, %s28
      %s29 = sphi 0, %s26
      %s30 = sphi 0, %s29
      %s46 = sphi 0, %s30
      %s50 = sphi 0, %s50
      %s52 = sphi 0, %s50
      %s53 = sphi 0, %s52
      %s67 = sphi 0, %s53
      %s71 = sphi 0, %s71
      %s73 = sphi 0, %s71
      %s74 = sphi 0, %s73
      %s88 = sphi 0, %s74
      %s94 = sphi 0, %s96
      %s97 = sphi 0, %s94
      %s98 = sphi 0, %s97
      %s114 = sphi 0, %s98
    $region4: #{tpu_custom_call.1} parent=1 // loop_header_branch
      %19 = sbr.rel (%p17) target = $region8
    $region5: #{tpu_custom_call.1} parent=1 // loop_body
      %s21 = ssub.s32 %s16, 1
      %s22 = ssub.s32 %s16, 2
      %s23 = sadd.s32 %s16, 1
      %s24 = ssub.s32 %s16, %s23
      %p25 = scmp.eq.s32.totalorder %s24, 0
      %s27 = sadd.s32 %s26, 1
      %s28 = scalar_select %p25, %s26, %s27
      %p31 = pneg %p25
      %p32 = scmp.eq.s32.totalorder %s16, 1
      %p33 = por %p31, %p32
      %p34 = scmp.ne.s32.totalorder %s26, %s29
      %p35 = scmp.eq.s32.totalorder %s16, 0
      %p36 = por %p34, %p35
      %p37 = scmp.ne.s32.totalorder %s26, %s29
      %p38 = scmp.eq.s32.totalorder %s21, 1
      %p39 = por %p37, %p38
      %p40 = scmp.ne.s32.totalorder %s29, %s30
      %p41 = scmp.eq.s32.totalorder %s21, 0
      %p42 = por %p40, %p41
      %p43 = scmp.ne.s32.totalorder %s29, %s30
      %p44 = scmp.eq.s32.totalorder %s22, 1
      %p45 = por %p43, %p44
      %p47 = scmp.ne.s32.totalorder %s30, %s46
      %p48 = scmp.eq.s32.totalorder %s22, 0
      %p49 = por %p47, %p48
      %s51 = sadd.s32 %s50, 1
      %p54 = scmp.eq.s32.totalorder %s16, 1
      %p55 = scmp.ne.s32.totalorder %s50, %s52
      %p56 = scmp.eq.s32.totalorder %s16, 0
      %p57 = por %p55, %p56
      %p58 = scmp.ne.s32.totalorder %s50, %s52
      %p59 = scmp.eq.s32.totalorder %s21, 1
      %p60 = por %p58, %p59
      %p61 = scmp.ne.s32.totalorder %s52, %s53
      %p62 = scmp.eq.s32.totalorder %s21, 0
      %p63 = por %p61, %p62
      %p64 = scmp.ne.s32.totalorder %s52, %s53
      %p65 = scmp.eq.s32.totalorder %s22, 1
      %p66 = por %p64, %p65
      %p68 = scmp.ne.s32.totalorder %s53, %s67
      %p69 = scmp.eq.s32.totalorder %s22, 0
      %p70 = por %p68, %p69
      %s72 = sadd.s32 %s71, 1
      %p75 = scmp.eq.s32.totalorder %s16, 1
      %p76 = scmp.ne.s32.totalorder %s71, %s73
      %p77 = scmp.eq.s32.totalorder %s16, 0
      %p78 = por %p76, %p77
      %p79 = scmp.ne.s32.totalorder %s71, %s73
      %p80 = scmp.eq.s32.totalorder %s21, 1
      %p81 = por %p79, %p80
      %p82 = scmp.ne.s32.totalorder %s73, %s74
      %p83 = scmp.eq.s32.totalorder %s21, 0
      %p84 = por %p82, %p83
      %p85 = scmp.ne.s32.totalorder %s73, %s74
      %p86 = scmp.eq.s32.totalorder %s22, 1
      %p87 = por %p85, %p86
      %p89 = scmp.ne.s32.totalorder %s74, %s88
      %p90 = scmp.eq.s32.totalorder %s22, 0
      %p91 = por %p89, %p90
      %s92 = ssub.s32 %s16, %s23
      %p93 = scmp.eq.s32.totalorder %s92, 0
      %s95 = sadd.s32 %s94, 1
      %s96 = scalar_select %p93, %s94, %s95
      %p99 = pneg %p93
      %p100 = scmp.eq.s32.totalorder %s16, 1
      %p101 = por %p99, %p100
      %p102 = scmp.ne.s32.totalorder %s94, %s97
      %p103 = scmp.eq.s32.totalorder %s16, 0
      %p104 = por %p102, %p103
      %p105 = scmp.ne.s32.totalorder %s94, %s97
      %p106 = scmp.eq.s32.totalorder %s21, 1
      %p107 = por %p105, %p106
      %p108 = scmp.ne.s32.totalorder %s97, %s98
      %p109 = scmp.eq.s32.totalorder %s21, 0
      %p110 = por %p108, %p109
      %p111 = scmp.ne.s32.totalorder %s97, %s98
      %p112 = scmp.eq.s32.totalorder %s22, 1
      %p113 = por %p111, %p112
      %p115 = scmp.ne.s32.totalorder %s98, %s114
      %p116 = scmp.eq.s32.totalorder %s22, 0
      %p117 = por %p115, %p116
      %p118 = scmp.le.s32.totalorder 1, %s16
      %p119 = scmp.lt.s32.totalorder %s16, 3
      %p120 = pnand %p118, %p119
      %p121 = pneg %p120
      // Predicated region
      $region9: #{tpu_custom_call.1} parent=5 // pred_check
        _
      $region10: #{tpu_custom_call.1} parent=5 // pred_check_branch
        %123 = sbr.rel (%p120) target = $region12
      $region11: #{tpu_custom_call.1} parent=5 // pred_region
        %s124 = ssub.s32 %s16, 1
        // Predicated region
        $region13: #{tpu_custom_call.1} parent=11 // pred_check
          %p125 = pneg %p63
        $region14: #{tpu_custom_call.1} parent=11 // pred_check_branch
          %127 = sbr.rel (%p125) target = $region16
        $region15: #{tpu_custom_call.1} parent=11 // pred_region
          %129 = vsyncadd [#allocation6], 0
          %s130 = sshll.u32 %s1, 4
          %s131 = int_to_ptr.hbm [resolvable:$true] %s130
          %s132 = sshll.u32 [#allocation5], 4
          %s133 = int_to_ptr.vmem [resolvable:$true] %s132
          %138 = dma.hbm_to_vmem [thread:$0]  %s131, 14336, %s133, [#allocation6], 64, 64, 4
        $region16: #{tpu_custom_call.1} parent=11 // pred_fallthru
          _
        // Predicated region
        $region17: #{tpu_custom_call.1} parent=11 // pred_check
          %p139 = pneg %p84
        $region18: #{tpu_custom_call.1} parent=11 // pred_check_branch
          %141 = sbr.rel (%p139) target = $region20
        $region19: #{tpu_custom_call.1} parent=11 // pred_region
          %143 = vsyncadd [#allocation6], 0
          %s144 = sshll.u32 %s2, 4
          %s145 = int_to_ptr.hbm [resolvable:$true] %s144
          %s146 = sshll.u32 [#allocation7], 4
          %s147 = int_to_ptr.vmem [resolvable:$true] %s146
          %152 = dma.hbm_to_vmem [thread:$0]  %s145, 224, %s147, [#allocation6], 16, 16, 1
        $region20: #{tpu_custom_call.1} parent=11 // pred_fallthru
          _
      $region12: #{tpu_custom_call.1} parent=5 // pred_fallthru
        _
      %p153 = scmp.lt.s32.totalorder %s16, 2
      // Predicated region
      $region21: #{tpu_custom_call.1} parent=5 // pred_check
        %p154 = pneg %p153
      $region22: #{tpu_custom_call.1} parent=5 // pred_check_branch
        %156 = sbr.rel (%p154) target = $region24
      $region23: #{tpu_custom_call.1} parent=5 // pred_region
        // Predicated region
        $region25: #{tpu_custom_call.1} parent=23 // pred_check
          %p157 = pneg %p36
        $region26: #{tpu_custom_call.1} parent=23 // pred_check_branch
          %159 = sbr.rel (%p157) target = $region28
        $region27: #{tpu_custom_call.1} parent=23 // pred_region
          %s160 = sand.u32 %s26, 1
          %s161 = scalar_lea.sflag [#allocation3], %s160
          %s162 = sand.u32 %s26, 1
          %s163 = smul.addr %s162, 16
          %s164 = scalar_lea.vmem [#allocation2], %s163
          %s165 = smul.u32 4, %s16
          %167 = vsyncadd %s161, 0
          %s168 = smul.addr %s165, 4
          %s169 = scalar_lea.hbm %s0, %s168
          %s170 = sshll.u32 %s169, 4
          %s171 = int_to_ptr.hbm [resolvable:$true] %s170
          %s172 = sshll.u32 %s164, 4
          %s173 = int_to_ptr.vmem [resolvable:$true] %s172
          %178 = dma.hbm_to_vmem [thread:$0]  %s171, 256, %s173, %s161, 64, 64, 4
        $region28: #{tpu_custom_call.1} parent=23 // pred_fallthru
          _
      $region24: #{tpu_custom_call.1} parent=5 // pred_fallthru
        _
      %p179 = scmp.le.s32.totalorder 1, %s16
      %p180 = scmp.lt.s32.totalorder %s16, 3
      %p181 = pnand %p179, %p180
      %p182 = pneg %p181
      // Predicated region
      $region29: #{tpu_custom_call.1} parent=5 // pred_check
        _
      $region30: #{tpu_custom_call.1} parent=5 // pred_check_branch
        %184 = sbr.rel (%p181) target = $region32
      $region31: #{tpu_custom_call.1} parent=5 // pred_region
        %s185 = ssub.s32 %s16, 1
        %s186 = sand.u32 %s29, 1
        %s187 = scalar_lea.sflag [#allocation3], %s186
        %s188 = sand.u32 %s29, 1
        %s189 = smul.addr %s188, 16
        %s190 = scalar_lea.vmem [#allocation2], %s189
        // Predicated region
        $region33: #{tpu_custom_call.1} parent=31 // pred_check
          %p191 = pneg %p42
        $region34: #{tpu_custom_call.1} parent=31 // pred_check_branch
          %193 = sbr.rel (%p191) target = $region36
        $region35: #{tpu_custom_call.1} parent=31 // pred_region
          %195 = dma.done %s187, 256
        $region36: #{tpu_custom_call.1} parent=31 // pred_fallthru
          _
        // Predicated region
        $region37: #{tpu_custom_call.1} parent=31 // pred_check
          %p196 = pneg %p63
        $region38: #{tpu_custom_call.1} parent=31 // pred_check_branch
          %198 = sbr.rel (%p196) target = $region40
        $region39: #{tpu_custom_call.1} parent=31 // pred_region
          %200 = dma.done [#allocation6], 14336
        $region40: #{tpu_custom_call.1} parent=31 // pred_fallthru
          _
        // Predicated region
        $region41: #{tpu_custom_call.1} parent=31 // pred_check
          %p201 = pneg %p84
        $region42: #{tpu_custom_call.1} parent=31 // pred_check_branch
          %203 = sbr.rel (%p201) target = $region44
        $region43: #{tpu_custom_call.1} parent=31 // pred_region
          %205 = dma.done [#allocation6], 224
        $region44: #{tpu_custom_call.1} parent=31 // pred_fallthru
          _
        %s206 = sand.u32 %s29, 1
        %s207 = scalar_lea.sflag [#allocation3], %s206
        %s208 = sand.u32 %s29, 1
        %s209 = smul.addr %s208, 16
        %s210 = scalar_lea.vmem [#allocation2], %s209
        %p211 = pneg %p42
        %p212 = pneg %p39
        %p213 = pneg %p63
        %p214 = pneg %p60
        %p215 = pneg %p84
        %p216 = pneg %p81
        %p217 = pneg %p110
        %p218 = pneg %p107
        %s219 = sand.u32 %s97, 1
        %s220 = scalar_lea.sflag [#allocation4], %s219
        %s221 = sand.u32 %s97, 1
        %s222 = smul.addr %s221, 8
        %s223 = scalar_lea.vmem [#allocation8], %s222
        %s224 = smul.u32 4, %s21
        %s225 = smul.u32 2, %s21
        %v226 = vld [vmem:[%s190] sm:$0xf]
        %v227 = vld [vmem:[%s190 + $0x4] sm:$0xf]
        %v228 = vld [vmem:[%s190 + $0x8] sm:$0xf]
        %v229 = vld [vmem:[%s190 + $0xc] sm:$0xf]
        %v230 = vld [vmem:[#allocation5] sm:$0xf]
        %v231 = vld [vmem:[#allocation5 + $0x4] sm:$0xf]
        %v232 = vld [vmem:[#allocation5 + $0x8] sm:$0xf]
        %v233 = vld [vmem:[#allocation5 + $0xc] sm:$0xf]
        %v234 = vld [vmem:[#allocation5 + $0x10] sm:$0xf]
        %v235 = vld [vmem:[#allocation5 + $0x14] sm:$0xf]
        %v236 = vld [vmem:[#allocation5 + $0x18] sm:$0xf]
        %v237 = vld [vmem:[#allocation5 + $0x1c] sm:$0xf]
        %v238 = vld [vmem:[#allocation5 + $0x20] sm:$0xf]
        %v239 = vld [vmem:[#allocation5 + $0x24] sm:$0xf]
        %v240 = vld [vmem:[#allocation5 + $0x28] sm:$0xf]
        %v241 = vld [vmem:[#allocation5 + $0x2c] sm:$0xf]
        %v242 = vld [vmem:[#allocation5 + $0x30] sm:$0xf]
        %v243 = vld [vmem:[#allocation5 + $0x34] sm:$0xf]
        %v244 = vld [vmem:[#allocation5 + $0x38] sm:$0xf]
        %v245 = vld [vmem:[#allocation5 + $0x3c] sm:$0xf]
        %v246 = vld [vmem:[#allocation7] sm:$0x1]
        %v248 = vperm.slane %v246, 0
        %v252 = vunpack.c.l.b16 %v226
        %v253 = vunpack.c.l.b16 %v227
        %v254 = vpack.c.b16 %v253, %v252
        %v272 = vunpack.c.l.b16 %v230
        %v273 = vunpack.c.l.b16 %v231
        %v274 = vunpack.c.l.b16 %v232
        %v275 = vunpack.c.l.b16 %v233
        %v276 = vunpack.c.l.b16 %v234
        %v277 = vunpack.c.l.b16 %v235
        %v278 = vunpack.c.l.b16 %v236
        %v279 = vunpack.c.l.b16 %v237
        %v280 = vunpack.c.l.b16 %v238
        %v281 = vunpack.c.l.b16 %v239
        %v282 = vunpack.c.l.b16 %v240
        %v283 = vunpack.c.l.b16 %v241
        %v284 = vunpack.c.l.b16 %v242
        %v285 = vunpack.c.l.b16 %v243
        %v286 = vunpack.c.l.b16 %v244
        %v287 = vunpack.c.l.b16 %v245
        %v288 = vpack.c.b16 %v273, %v272
        %v289 = vpack.c.b16 %v275, %v274
        %v290 = vpack.c.b16 %v277, %v276
        %v291 = vpack.c.b16 %v279, %v278
        %v292 = vpack.c.b16 %v281, %v280
        %v293 = vpack.c.b16 %v283, %v282
        %v294 = vpack.c.b16 %v285, %v284
        %v295 = vpack.c.b16 %v287, %v286
        %304 = vmatpush.bf16.msra.mxu0 %v295
        %305 = vmatpush.bf16.msra.mxu0 %v294
        %306 = vmatpush.bf16.msra.mxu0 %v293
        %307 = vmatpush.bf16.msra.mxu0 %v292
        %308 = vmatpush.bf16.msra.mxu0 %v291
        %309 = vmatpush.bf16.msra.mxu0 %v290
        %310 = vmatpush.bf16.msra.mxu0 %v289
        %311 = vmatpush.bf16.msra.mxu0 %v288
        %312 = vmatmul.bf16.gmra.mxu0 %v254
        %v313 = vpop.f32.mrf.mxu0
        %v314 = vadd.f32 %v248, %v313
        %v315 = vpop.f32.mrf.mxu0
        %v316 = vadd.f32 %v248, %v315
        %317 = vdwg.mxu0
        %v318 = vmax.f32 %v314, 0.0
        %v319 = vmax.f32 %v316, 0.0
        %s320 = scalar_lea.vmem [#allocation5], 64
        %v321 = vld [vmem:[%s320] sm:$0xf]
        %v322 = vld [vmem:[%s320 + $0x4] sm:$0xf]
        %v323 = vld [vmem:[%s320 + $0x8] sm:$0xf]
        %v324 = vld [vmem:[%s320 + $0xc] sm:$0xf]
        %v325 = vld [vmem:[%s320 + $0x10] sm:$0xf]
        %v326 = vld [vmem:[%s320 + $0x14] sm:$0xf]
        %v327 = vld [vmem:[%s320 + $0x18] sm:$0xf]
        %v328 = vld [vmem:[%s320 + $0x1c] sm:$0xf]
        %v329 = vld [vmem:[%s320 + $0x20] sm:$0xf]
        %v330 = vld [vmem:[%s320 + $0x24] sm:$0xf]
        %v331 = vld [vmem:[%s320 + $0x28] sm:$0xf]
        %v332 = vld [vmem:[%s320 + $0x2c] sm:$0xf]
        %v333 = vld [vmem:[%s320 + $0x30] sm:$0xf]
        %v334 = vld [vmem:[%s320 + $0x34] sm:$0xf]
        %v335 = vld [vmem:[%s320 + $0x38] sm:$0xf]
        %v336 = vld [vmem:[%s320 + $0x3c] sm:$0xf]
        %s337 = scalar_lea.vmem [#allocation7], 1
        %v338 = vld [vmem:[%s337] sm:$0x1]
        %v340 = vperm.slane %v338, 0
        %v344 = vunpack.c.l.b16 %v228
        %v345 = vunpack.c.l.b16 %v229
        %v346 = vpack.c.b16 %v345, %v344
        %v364 = vunpack.c.l.b16 %v321
        %v365 = vunpack.c.l.b16 %v322
        %v366 = vunpack.c.l.b16 %v323
        %v367 = vunpack.c.l.b16 %v324
        %v368 = vunpack.c.l.b16 %v325
        %v369 = vunpack.c.l.b16 %v326
        %v370 = vunpack.c.l.b16 %v327
        %v371 = vunpack.c.l.b16 %v328
        %v372 = vunpack.c.l.b16 %v329
        %v373 = vunpack.c.l.b16 %v330
        %v374 = vunpack.c.l.b16 %v331
        %v375 = vunpack.c.l.b16 %v332
        %v376 = vunpack.c.l.b16 %v333
        %v377 = vunpack.c.l.b16 %v334
        %v378 = vunpack.c.l.b16 %v335
        %v379 = vunpack.c.l.b16 %v336
        %v380 = vpack.c.b16 %v365, %v364
        %v381 = vpack.c.b16 %v367, %v366
        %v382 = vpack.c.b16 %v369, %v368
        %v383 = vpack.c.b16 %v371, %v370
        %v384 = vpack.c.b16 %v373, %v372
        %v385 = vpack.c.b16 %v375, %v374
        %v386 = vpack.c.b16 %v377, %v376
        %v387 = vpack.c.b16 %v379, %v378
        %396 = vmatpush.bf16.msra.mxu0 %v387
        %397 = vmatpush.bf16.msra.mxu0 %v386
        %398 = vmatpush.bf16.msra.mxu0 %v385
        %399 = vmatpush.bf16.msra.mxu0 %v384
        %400 = vmatpush.bf16.msra.mxu0 %v383
        %401 = vmatpush.bf16.msra.mxu0 %v382
        %402 = vmatpush.bf16.msra.mxu0 %v381
        %403 = vmatpush.bf16.msra.mxu0 %v380
        %404 = vmatmul.bf16.gmra.mxu0 %v346
        %v405 = vpop.f32.mrf.mxu0
        %v406 = vadd.f32 %v340, %v405
        %v407 = vpop.f32.mrf.mxu0
        %v408 = vadd.f32 %v340, %v407
        %409 = vdwg.mxu0
        %v410 = vmax.f32 %v406, 0.0
        %v411 = vmax.f32 %v408, 0.0
        %v412 = vadd.f32 %v318, %v410
        %v413 = vadd.f32 %v319, %v411
        %v414 = vlaneseq
        %v415 = vand.u32 %v414, 127
        %vm416 = vcmp.lt.s32.totalorder %v415, 0
        %v417 = vsub.s32 0, %v415
        %v418 = vsel %vm416, %v417, %v415
        %v419 = vshrl.u32 %v418, 6
        %v420 = vand.u32 %v418, 63
        %v421 = vsub.s32 0, %v420
        %v422 = vsel %vm416, %v421, %v420
        %vm423 = vcmp.ne.s32.totalorder %v422, 0
        %vm424 = vcmp.lt.s32.totalorder %v422, 0
        %vm425 = vmand %vm424, %vm423
        %v426 = vadd.s32 %v422, 64
        %v427 = vsel %vm425, %v426, %v422
        %v428 = vpack.c.bf16 %v413, %v412
        %s429 = scalar_lea.vmem [#allocation5], 128
        %v430 = vld [vmem:[%s429] sm:$0xf]
        %v431 = vld [vmem:[%s429 + $0x4] sm:$0xf]
        %v432 = vld [vmem:[%s429 + $0x8] sm:$0xf]
        %v433 = vld [vmem:[%s429 + $0xc] sm:$0xf]
        %v434 = vld [vmem:[%s429 + $0x10] sm:$0xf]
        %v435 = vld [vmem:[%s429 + $0x14] sm:$0xf]
        %v436 = vld [vmem:[%s429 + $0x18] sm:$0xf]
        %v437 = vld [vmem:[%s429 + $0x1c] sm:$0xf]
        %v438 = vld [vmem:[%s429 + $0x20] sm:$0xf]
        %v439 = vld [vmem:[%s429 + $0x24] sm:$0xf]
        %v440 = vld [vmem:[%s429 + $0x28] sm:$0xf]
        %v441 = vld [vmem:[%s429 + $0x2c] sm:$0xf]
        %v442 = vld [vmem:[%s429 + $0x30] sm:$0xf]
        %v443 = vld [vmem:[%s429 + $0x34] sm:$0xf]
        %v444 = vld [vmem:[%s429 + $0x38] sm:$0xf]
        %v445 = vld [vmem:[%s429 + $0x3c] sm:$0xf]
        %s446 = scalar_lea.vmem [#allocation7], 2
        %v447 = vld [vmem:[%s446] sm:$0x1]
        %v449 = vperm.slane %v447, 0
        %v467 = vunpack.c.l.b16 %v430
        %v468 = vunpack.c.l.b16 %v431
        %v469 = vunpack.c.l.b16 %v432
        %v470 = vunpack.c.l.b16 %v433
        %v471 = vunpack.c.l.b16 %v434
        %v472 = vunpack.c.l.b16 %v435
        %v473 = vunpack.c.l.b16 %v436
        %v474 = vunpack.c.l.b16 %v437
        %v475 = vunpack.c.l.b16 %v438
        %v476 = vunpack.c.l.b16 %v439
        %v477 = vunpack.c.l.b16 %v440
        %v478 = vunpack.c.l.b16 %v441
        %v479 = vunpack.c.l.b16 %v442
        %v480 = vunpack.c.l.b16 %v443
        %v481 = vunpack.c.l.b16 %v444
        %v482 = vunpack.c.l.b16 %v445
        %v483 = vpack.c.b16 %v468, %v467
        %v484 = vpack.c.b16 %v470, %v469
        %v485 = vpack.c.b16 %v472, %v471
        %v486 = vpack.c.b16 %v474, %v473
        %v487 = vpack.c.b16 %v476, %v475
        %v488 = vpack.c.b16 %v478, %v477
        %v489 = vpack.c.b16 %v480, %v479
        %v490 = vpack.c.b16 %v482, %v481
        %499 = vmatpush.bf16.msra.mxu0 %v490
        %500 = vmatpush.bf16.msra.mxu0 %v489
        %501 = vmatpush.bf16.msra.mxu0 %v488
        %502 = vmatpush.bf16.msra.mxu0 %v487
        %503 = vmatpush.bf16.msra.mxu0 %v486
        %504 = vmatpush.bf16.msra.mxu0 %v485
        %505 = vmatpush.bf16.msra.mxu0 %v484
        %506 = vmatpush.bf16.msra.mxu0 %v483
        %507 = vmatmul.bf16.gmra.mxu0 %v428
        %v508 = vpop.f32.mrf.mxu0
        %v509 = vadd.f32 %v449, %v508
        %v510 = vpop.f32.mrf.mxu0
        %v511 = vadd.f32 %v449, %v510
        %512 = vdwg.mxu0
        %v513 = vmax.f32 %v509, 0.0
        %v514 = vmax.f32 %v511, 0.0
        %v515 = vpack.c.bf16 %v514, %v513
        %s516 = scalar_lea.vmem [#allocation5], 192
        %v517 = vld [vmem:[%s516] sm:$0xf]
        %v518 = vld [vmem:[%s516 + $0x4] sm:$0xf]
        %v519 = vld [vmem:[%s516 + $0x8] sm:$0xf]
        %v520 = vld [vmem:[%s516 + $0xc] sm:$0xf]
        %v521 = vld [vmem:[%s516 + $0x10] sm:$0xf]
        %v522 = vld [vmem:[%s516 + $0x14] sm:$0xf]
        %v523 = vld [vmem:[%s516 + $0x18] sm:$0xf]
        %v524 = vld [vmem:[%s516 + $0x1c] sm:$0xf]
        %v525 = vld [vmem:[%s516 + $0x20] sm:$0xf]
        %v526 = vld [vmem:[%s516 + $0x24] sm:$0xf]
        %v527 = vld [vmem:[%s516 + $0x28] sm:$0xf]
        %v528 = vld [vmem:[%s516 + $0x2c] sm:$0xf]
        %v529 = vld [vmem:[%s516 + $0x30] sm:$0xf]
        %v530 = vld [vmem:[%s516 + $0x34] sm:$0xf]
        %v531 = vld [vmem:[%s516 + $0x38] sm:$0xf]
        %v532 = vld [vmem:[%s516 + $0x3c] sm:$0xf]
        %s533 = scalar_lea.vmem [#allocation7], 3
        %v534 = vld [vmem:[%s533] sm:$0x1]
        %v536 = vperm.slane %v534, 0
        %v554 = vunpack.c.l.b16 %v517
        %v555 = vunpack.c.l.b16 %v518
        %v556 = vunpack.c.l.b16 %v519
        %v557 = vunpack.c.l.b16 %v520
        %v558 = vunpack.c.l.b16 %v521
        %v559 = vunpack.c.l.b16 %v522
        %v560 = vunpack.c.l.b16 %v523
        %v561 = vunpack.c.l.b16 %v524
        %v562 = vunpack.c.l.b16 %v525
        %v563 = vunpack.c.l.b16 %v526
        %v564 = vunpack.c.l.b16 %v527
        %v565 = vunpack.c.l.b16 %v528
        %v566 = vunpack.c.l.b16 %v529
        %v567 = vunpack.c.l.b16 %v530
        %v568 = vunpack.c.l.b16 %v531
        %v569 = vunpack.c.l.b16 %v532
        %v570 = vpack.c.b16 %v555, %v554
        %v571 = vpack.c.b16 %v557, %v556
        %v572 = vpack.c.b16 %v559, %v558
        %v573 = vpack.c.b16 %v561, %v560
        %v574 = vpack.c.b16 %v563, %v562
        %v575 = vpack.c.b16 %v565, %v564
        %v576 = vpack.c.b16 %v567, %v566
        %v577 = vpack.c.b16 %v569, %v568
        %586 = vmatpush.bf16.msra.mxu0 %v577
        %587 = vmatpush.bf16.msra.mxu0 %v576
        %588 = vmatpush.bf16.msra.mxu0 %v575
        %589 = vmatpush.bf16.msra.mxu0 %v574
        %590 = vmatpush.bf16.msra.mxu0 %v573
        %591 = vmatpush.bf16.msra.mxu0 %v572
        %592 = vmatpush.bf16.msra.mxu0 %v571
        %593 = vmatpush.bf16.msra.mxu0 %v570
        %594 = vmatmul.bf16.gmra.mxu0 %v515
        %v595 = vpop.f32.mrf.mxu0
        %v596 = vadd.f32 %v536, %v595
        %v597 = vpop.f32.mrf.mxu0
        %v598 = vadd.f32 %v536, %v597
        %599 = vdwg.mxu0
        %v600 = vadd.f32 %v596, %v412
        %v601 = vadd.f32 %v598, %v413
        %v602 = vpack.c.bf16 %v601, %v600
        %s603 = scalar_lea.vmem [#allocation5], 256
        %v604 = vld [vmem:[%s603] sm:$0xf]
        %v605 = vld [vmem:[%s603 + $0x4] sm:$0xf]
        %v606 = vld [vmem:[%s603 + $0x8] sm:$0xf]
        %v607 = vld [vmem:[%s603 + $0xc] sm:$0xf]
        %v608 = vld [vmem:[%s603 + $0x10] sm:$0xf]
        %v609 = vld [vmem:[%s603 + $0x14] sm:$0xf]
        %v610 = vld [vmem:[%s603 + $0x18] sm:$0xf]
        %v611 = vld [vmem:[%s603 + $0x1c] sm:$0xf]
        %v612 = vld [vmem:[%s603 + $0x20] sm:$0xf]
        %v613 = vld [vmem:[%s603 + $0x24] sm:$0xf]
        %v614 = vld [vmem:[%s603 + $0x28] sm:$0xf]
        %v615 = vld [vmem:[%s603 + $0x2c] sm:$0xf]
        %v616 = vld [vmem:[%s603 + $0x30] sm:$0xf]
        %v617 = vld [vmem:[%s603 + $0x34] sm:$0xf]
        %v618 = vld [vmem:[%s603 + $0x38] sm:$0xf]
        %v619 = vld [vmem:[%s603 + $0x3c] sm:$0xf]
        %s620 = scalar_lea.vmem [#allocation7], 4
        %v621 = vld [vmem:[%s620] sm:$0x1]
        %v623 = vperm.slane %v621, 0
        %v641 = vunpack.c.l.b16 %v604
        %v642 = vunpack.c.l.b16 %v605
        %v643 = vunpack.c.l.b16 %v606
        %v644 = vunpack.c.l.b16 %v607
        %v645 = vunpack.c.l.b16 %v608
        %v646 = vunpack.c.l.b16 %v609
        %v647 = vunpack.c.l.b16 %v610
        %v648 = vunpack.c.l.b16 %v611
        %v649 = vunpack.c.l.b16 %v612
        %v650 = vunpack.c.l.b16 %v613
        %v651 = vunpack.c.l.b16 %v614
        %v652 = vunpack.c.l.b16 %v615
        %v653 = vunpack.c.l.b16 %v616
        %v654 = vunpack.c.l.b16 %v617
        %v655 = vunpack.c.l.b16 %v618
        %v656 = vunpack.c.l.b16 %v619
        %v657 = vpack.c.b16 %v642, %v641
        %v658 = vpack.c.b16 %v644, %v643
        %v659 = vpack.c.b16 %v646, %v645
        %v660 = vpack.c.b16 %v648, %v647
        %v661 = vpack.c.b16 %v650, %v649
        %v662 = vpack.c.b16 %v652, %v651
        %v663 = vpack.c.b16 %v654, %v653
        %v664 = vpack.c.b16 %v656, %v655
        %673 = vmatpush.bf16.msra.mxu0 %v664
        %674 = vmatpush.bf16.msra.mxu0 %v663
        %675 = vmatpush.bf16.msra.mxu0 %v662
        %676 = vmatpush.bf16.msra.mxu0 %v661
        %677 = vmatpush.bf16.msra.mxu0 %v660
        %678 = vmatpush.bf16.msra.mxu0 %v659
        %679 = vmatpush.bf16.msra.mxu0 %v658
        %680 = vmatpush.bf16.msra.mxu0 %v657
        %681 = vmatmul.bf16.gmra.mxu0 %v602
        %v682 = vpop.f32.mrf.mxu0
        %v683 = vadd.f32 %v623, %v682
        %v684 = vpop.f32.mrf.mxu0
        %v685 = vadd.f32 %v623, %v684
        %686 = vdwg.mxu0
        %v687 = vmax.f32 %v683, 0.0
        %v688 = vmax.f32 %v685, 0.0
        %v689 = vpack.c.bf16 %v688, %v687
        %s690 = scalar_lea.vmem [#allocation5], 320
        %v691 = vld [vmem:[%s690] sm:$0xf]
        %v692 = vld [vmem:[%s690 + $0x4] sm:$0xf]
        %v693 = vld [vmem:[%s690 + $0x8] sm:$0xf]
        %v694 = vld [vmem:[%s690 + $0xc] sm:$0xf]
        %v695 = vld [vmem:[%s690 + $0x10] sm:$0xf]
        %v696 = vld [vmem:[%s690 + $0x14] sm:$0xf]
        %v697 = vld [vmem:[%s690 + $0x18] sm:$0xf]
        %v698 = vld [vmem:[%s690 + $0x1c] sm:$0xf]
        %v699 = vld [vmem:[%s690 + $0x20] sm:$0xf]
        %v700 = vld [vmem:[%s690 + $0x24] sm:$0xf]
        %v701 = vld [vmem:[%s690 + $0x28] sm:$0xf]
        %v702 = vld [vmem:[%s690 + $0x2c] sm:$0xf]
        %v703 = vld [vmem:[%s690 + $0x30] sm:$0xf]
        %v704 = vld [vmem:[%s690 + $0x34] sm:$0xf]
        %v705 = vld [vmem:[%s690 + $0x38] sm:$0xf]
        %v706 = vld [vmem:[%s690 + $0x3c] sm:$0xf]
        %s707 = scalar_lea.vmem [#allocation7], 5
        %v708 = vld [vmem:[%s707] sm:$0x1]
        %v710 = vperm.slane %v708, 0
        %v728 = vunpack.c.l.b16 %v691
        %v729 = vunpack.c.l.b16 %v692
        %v730 = vunpack.c.l.b16 %v693
        %v731 = vunpack.c.l.b16 %v694
        %v732 = vunpack.c.l.b16 %v695
        %v733 = vunpack.c.l.b16 %v696
        %v734 = vunpack.c.l.b16 %v697
        %v735 = vunpack.c.l.b16 %v698
        %v736 = vunpack.c.l.b16 %v699
        %v737 = vunpack.c.l.b16 %v700
        %v738 = vunpack.c.l.b16 %v701
        %v739 = vunpack.c.l.b16 %v702
        %v740 = vunpack.c.l.b16 %v703
        %v741 = vunpack.c.l.b16 %v704
        %v742 = vunpack.c.l.b16 %v705
        %v743 = vunpack.c.l.b16 %v706
        %v744 = vpack.c.b16 %v729, %v728
        %v745 = vpack.c.b16 %v731, %v730
        %v746 = vpack.c.b16 %v733, %v732
        %v747 = vpack.c.b16 %v735, %v734
        %v748 = vpack.c.b16 %v737, %v736
        %v749 = vpack.c.b16 %v739, %v738
        %v750 = vpack.c.b16 %v741, %v740
        %v751 = vpack.c.b16 %v743, %v742
        %760 = vmatpush.bf16.msra.mxu0 %v751
        %761 = vmatpush.bf16.msra.mxu0 %v750
        %762 = vmatpush.bf16.msra.mxu0 %v749
        %763 = vmatpush.bf16.msra.mxu0 %v748
        %764 = vmatpush.bf16.msra.mxu0 %v747
        %765 = vmatpush.bf16.msra.mxu0 %v746
        %766 = vmatpush.bf16.msra.mxu0 %v745
        %767 = vmatpush.bf16.msra.mxu0 %v744
        %768 = vmatmul.bf16.gmra.mxu0 %v689
        %v769 = vpop.f32.mrf.mxu0
        %v770 = vadd.f32 %v710, %v769
        %v771 = vpop.f32.mrf.mxu0
        %v772 = vadd.f32 %v710, %v771
        %773 = vdwg.mxu0
        %v774 = vadd.f32 %v770, %v600
        %v775 = vadd.f32 %v772, %v601
        %v776 = vpack.c.bf16 %v775, %v774
        %s777 = scalar_lea.vmem [#allocation5], 384
        %v778 = vld [vmem:[%s777] sm:$0xf]
        %v779 = vld [vmem:[%s777 + $0x4] sm:$0xf]
        %v780 = vld [vmem:[%s777 + $0x8] sm:$0xf]
        %v781 = vld [vmem:[%s777 + $0xc] sm:$0xf]
        %v782 = vld [vmem:[%s777 + $0x10] sm:$0xf]
        %v783 = vld [vmem:[%s777 + $0x14] sm:$0xf]
        %v784 = vld [vmem:[%s777 + $0x18] sm:$0xf]
        %v785 = vld [vmem:[%s777 + $0x1c] sm:$0xf]
        %v786 = vld [vmem:[%s777 + $0x20] sm:$0xf]
        %v787 = vld [vmem:[%s777 + $0x24] sm:$0xf]
        %v788 = vld [vmem:[%s777 + $0x28] sm:$0xf]
        %v789 = vld [vmem:[%s777 + $0x2c] sm:$0xf]
        %v790 = vld [vmem:[%s777 + $0x30] sm:$0xf]
        %v791 = vld [vmem:[%s777 + $0x34] sm:$0xf]
        %v792 = vld [vmem:[%s777 + $0x38] sm:$0xf]
        %v793 = vld [vmem:[%s777 + $0x3c] sm:$0xf]
        %s794 = scalar_lea.vmem [#allocation7], 6
        %v795 = vld [vmem:[%s794] sm:$0x1]
        %v797 = vperm.slane %v795, 0
        %v815 = vunpack.c.l.b16 %v778
        %v816 = vunpack.c.l.b16 %v779
        %v817 = vunpack.c.l.b16 %v780
        %v818 = vunpack.c.l.b16 %v781
        %v819 = vunpack.c.l.b16 %v782
        %v820 = vunpack.c.l.b16 %v783
        %v821 = vunpack.c.l.b16 %v784
        %v822 = vunpack.c.l.b16 %v785
        %v823 = vunpack.c.l.b16 %v786
        %v824 = vunpack.c.l.b16 %v787
        %v825 = vunpack.c.l.b16 %v788
        %v826 = vunpack.c.l.b16 %v789
        %v827 = vunpack.c.l.b16 %v790
        %v828 = vunpack.c.l.b16 %v791
        %v829 = vunpack.c.l.b16 %v792
        %v830 = vunpack.c.l.b16 %v793
        %v831 = vpack.c.b16 %v816, %v815
        %v832 = vpack.c.b16 %v818, %v817
        %v833 = vpack.c.b16 %v820, %v819
        %v834 = vpack.c.b16 %v822, %v821
        %v835 = vpack.c.b16 %v824, %v823
        %v836 = vpack.c.b16 %v826, %v825
        %v837 = vpack.c.b16 %v828, %v827
        %v838 = vpack.c.b16 %v830, %v829
        %847 = vmatpush.bf16.msra.mxu0 %v838
        %848 = vmatpush.bf16.msra.mxu0 %v837
        %849 = vmatpush.bf16.msra.mxu0 %v836
        %850 = vmatpush.bf16.msra.mxu0 %v835
        %851 = vmatpush.bf16.msra.mxu0 %v834
        %852 = vmatpush.bf16.msra.mxu0 %v833
        %853 = vmatpush.bf16.msra.mxu0 %v832
        %854 = vmatpush.bf16.msra.mxu0 %v831
        %855 = vmatmul.bf16.gmra.mxu0 %v776
        %v856 = vpop.f32.mrf.mxu0
        %v857 = vadd.f32 %v797, %v856
        %v858 = vpop.f32.mrf.mxu0
        %v859 = vadd.f32 %v797, %v858
        %860 = vdwg.mxu0
        %v861 = vmax.f32 %v857, 0.0
        %v862 = vmax.f32 %v859, 0.0
        %v863 = vpack.c.bf16 %v862, %v861
        %s864 = scalar_lea.vmem [#allocation5], 448
        %v865 = vld [vmem:[%s864] sm:$0xf]
        %v866 = vld [vmem:[%s864 + $0x4] sm:$0xf]
        %v867 = vld [vmem:[%s864 + $0x8] sm:$0xf]
        %v868 = vld [vmem:[%s864 + $0xc] sm:$0xf]
        %v869 = vld [vmem:[%s864 + $0x10] sm:$0xf]
        %v870 = vld [vmem:[%s864 + $0x14] sm:$0xf]
        %v871 = vld [vmem:[%s864 + $0x18] sm:$0xf]
        %v872 = vld [vmem:[%s864 + $0x1c] sm:$0xf]
        %v873 = vld [vmem:[%s864 + $0x20] sm:$0xf]
        %v874 = vld [vmem:[%s864 + $0x24] sm:$0xf]
        %v875 = vld [vmem:[%s864 + $0x28] sm:$0xf]
        %v876 = vld [vmem:[%s864 + $0x2c] sm:$0xf]
        %v877 = vld [vmem:[%s864 + $0x30] sm:$0xf]
        %v878 = vld [vmem:[%s864 + $0x34] sm:$0xf]
        %v879 = vld [vmem:[%s864 + $0x38] sm:$0xf]
        %v880 = vld [vmem:[%s864 + $0x3c] sm:$0xf]
        %s881 = scalar_lea.vmem [#allocation7], 7
        %v882 = vld [vmem:[%s881] sm:$0x1]
        %v884 = vperm.slane %v882, 0
        %v902 = vunpack.c.l.b16 %v865
        %v903 = vunpack.c.l.b16 %v866
        %v904 = vunpack.c.l.b16 %v867
        %v905 = vunpack.c.l.b16 %v868
        %v906 = vunpack.c.l.b16 %v869
        %v907 = vunpack.c.l.b16 %v870
        %v908 = vunpack.c.l.b16 %v871
        %v909 = vunpack.c.l.b16 %v872
        %v910 = vunpack.c.l.b16 %v873
        %v911 = vunpack.c.l.b16 %v874
        %v912 = vunpack.c.l.b16 %v875
        %v913 = vunpack.c.l.b16 %v876
        %v914 = vunpack.c.l.b16 %v877
        %v915 = vunpack.c.l.b16 %v878
        %v916 = vunpack.c.l.b16 %v879
        %v917 = vunpack.c.l.b16 %v880
        %v918 = vpack.c.b16 %v903, %v902
        %v919 = vpack.c.b16 %v905, %v904
        %v920 = vpack.c.b16 %v907, %v906
        %v921 = vpack.c.b16 %v909, %v908
        %v922 = vpack.c.b16 %v911, %v910
        %v923 = vpack.c.b16 %v913, %v912
        %v924 = vpack.c.b16 %v915, %v914
        %v925 = vpack.c.b16 %v917, %v916
        %934 = vmatpush.bf16.msra.mxu0 %v925
        %935 = vmatpush.bf16.msra.mxu0 %v924
        %936 = vmatpush.bf16.msra.mxu0 %v923
        %937 = vmatpush.bf16.msra.mxu0 %v922
        %938 = vmatpush.bf16.msra.mxu0 %v921
        %939 = vmatpush.bf16.msra.mxu0 %v920
        %940 = vmatpush.bf16.msra.mxu0 %v919
        %941 = vmatpush.bf16.msra.mxu0 %v918
        %942 = vmatmul.bf16.gmra.mxu0 %v863
        %v943 = vpop.f32.mrf.mxu0
        %v944 = vadd.f32 %v884, %v943
        %v945 = vpop.f32.mrf.mxu0
        %v946 = vadd.f32 %v884, %v945
        %947 = vdwg.mxu0
        %vm948 = vcmp.lt.s32.totalorder %v427, 32
        %v949 = vsel %vm948, %v857, 0.0
        %v950 = vsel %vm948, %v859, 0.0
        %v951 = vadd.f32 %v944, %v949
        %v952 = vadd.f32 %v946, %v950
        %v953 = vpack.c.bf16 %v952, %v951
        %s954 = scalar_lea.vmem [#allocation5], 512
        %v955 = vld [vmem:[%s954] sm:$0xf]
        %v956 = vld [vmem:[%s954 + $0x4] sm:$0xf]
        %v957 = vld [vmem:[%s954 + $0x8] sm:$0xf]
        %v958 = vld [vmem:[%s954 + $0xc] sm:$0xf]
        %v959 = vld [vmem:[%s954 + $0x10] sm:$0xf]
        %v960 = vld [vmem:[%s954 + $0x14] sm:$0xf]
        %v961 = vld [vmem:[%s954 + $0x18] sm:$0xf]
        %v962 = vld [vmem:[%s954 + $0x1c] sm:$0xf]
        %v963 = vld [vmem:[%s954 + $0x20] sm:$0xf]
        %v964 = vld [vmem:[%s954 + $0x24] sm:$0xf]
        %v965 = vld [vmem:[%s954 + $0x28] sm:$0xf]
        %v966 = vld [vmem:[%s954 + $0x2c] sm:$0xf]
        %v967 = vld [vmem:[%s954 + $0x30] sm:$0xf]
        %v968 = vld [vmem:[%s954 + $0x34] sm:$0xf]
        %v969 = vld [vmem:[%s954 + $0x38] sm:$0xf]
        %v970 = vld [vmem:[%s954 + $0x3c] sm:$0xf]
        %s971 = scalar_lea.vmem [#allocation7], 8
        %v972 = vld [vmem:[%s971] sm:$0x1]
        %v974 = vperm.slane %v972, 0
        %v992 = vunpack.c.l.b16 %v955
        %v993 = vunpack.c.l.b16 %v956
        %v994 = vunpack.c.l.b16 %v957
        %v995 = vunpack.c.l.b16 %v958
        %v996 = vunpack.c.l.b16 %v959
        %v997 = vunpack.c.l.b16 %v960
        %v998 = vunpack.c.l.b16 %v961
        %v999 = vunpack.c.l.b16 %v962
        %v1000 = vunpack.c.l.b16 %v963
        %v1001 = vunpack.c.l.b16 %v964
        %v1002 = vunpack.c.l.b16 %v965
        %v1003 = vunpack.c.l.b16 %v966
        %v1004 = vunpack.c.l.b16 %v967
        %v1005 = vunpack.c.l.b16 %v968
        %v1006 = vunpack.c.l.b16 %v969
        %v1007 = vunpack.c.l.b16 %v970
        %v1008 = vpack.c.b16 %v993, %v992
        %v1009 = vpack.c.b16 %v995, %v994
        %v1010 = vpack.c.b16 %v997, %v996
        %v1011 = vpack.c.b16 %v999, %v998
        %v1012 = vpack.c.b16 %v1001, %v1000
        %v1013 = vpack.c.b16 %v1003, %v1002
        %v1014 = vpack.c.b16 %v1005, %v1004
        %v1015 = vpack.c.b16 %v1007, %v1006
        %1024 = vmatpush.bf16.msra.mxu0 %v1015
        %1025 = vmatpush.bf16.msra.mxu0 %v1014
        %1026 = vmatpush.bf16.msra.mxu0 %v1013
        %1027 = vmatpush.bf16.msra.mxu0 %v1012
        %1028 = vmatpush.bf16.msra.mxu0 %v1011
        %1029 = vmatpush.bf16.msra.mxu0 %v1010
        %1030 = vmatpush.bf16.msra.mxu0 %v1009
        %1031 = vmatpush.bf16.msra.mxu0 %v1008
        %1032 = vmatmul.bf16.gmra.mxu0 %v953
        %v1033 = vpop.f32.mrf.mxu0
        %v1034 = vadd.f32 %v974, %v1033
        %v1035 = vpop.f32.mrf.mxu0
        %v1036 = vadd.f32 %v974, %v1035
        %1037 = vdwg.mxu0
        %v1038 = vmax.f32 %v1034, 0.0
        %v1039 = vmax.f32 %v1036, 0.0
        %v1040 = vpack.c.bf16 %v1039, %v1038
        %s1041 = scalar_lea.vmem [#allocation5], 576
        %v1042 = vld [vmem:[%s1041] sm:$0xf]
        %v1043 = vld [vmem:[%s1041 + $0x4] sm:$0xf]
        %v1044 = vld [vmem:[%s1041 + $0x8] sm:$0xf]
        %v1045 = vld [vmem:[%s1041 + $0xc] sm:$0xf]
        %v1046 = vld [vmem:[%s1041 + $0x10] sm:$0xf]
        %v1047 = vld [vmem:[%s1041 + $0x14] sm:$0xf]
        %v1048 = vld [vmem:[%s1041 + $0x18] sm:$0xf]
        %v1049 = vld [vmem:[%s1041 + $0x1c] sm:$0xf]
        %v1050 = vld [vmem:[%s1041 + $0x20] sm:$0xf]
        %v1051 = vld [vmem:[%s1041 + $0x24] sm:$0xf]
        %v1052 = vld [vmem:[%s1041 + $0x28] sm:$0xf]
        %v1053 = vld [vmem:[%s1041 + $0x2c] sm:$0xf]
        %v1054 = vld [vmem:[%s1041 + $0x30] sm:$0xf]
        %v1055 = vld [vmem:[%s1041 + $0x34] sm:$0xf]
        %v1056 = vld [vmem:[%s1041 + $0x38] sm:$0xf]
        %v1057 = vld [vmem:[%s1041 + $0x3c] sm:$0xf]
        %s1058 = scalar_lea.vmem [#allocation7], 9
        %v1059 = vld [vmem:[%s1058] sm:$0x1]
        %v1061 = vperm.slane %v1059, 0
        %v1079 = vunpack.c.l.b16 %v1042
        %v1080 = vunpack.c.l.b16 %v1043
        %v1081 = vunpack.c.l.b16 %v1044
        %v1082 = vunpack.c.l.b16 %v1045
        %v1083 = vunpack.c.l.b16 %v1046
        %v1084 = vunpack.c.l.b16 %v1047
        %v1085 = vunpack.c.l.b16 %v1048
        %v1086 = vunpack.c.l.b16 %v1049
        %v1087 = vunpack.c.l.b16 %v1050
        %v1088 = vunpack.c.l.b16 %v1051
        %v1089 = vunpack.c.l.b16 %v1052
        %v1090 = vunpack.c.l.b16 %v1053
        %v1091 = vunpack.c.l.b16 %v1054
        %v1092 = vunpack.c.l.b16 %v1055
        %v1093 = vunpack.c.l.b16 %v1056
        %v1094 = vunpack.c.l.b16 %v1057
        %v1095 = vpack.c.b16 %v1080, %v1079
        %v1096 = vpack.c.b16 %v1082, %v1081
        %v1097 = vpack.c.b16 %v1084, %v1083
        %v1098 = vpack.c.b16 %v1086, %v1085
        %v1099 = vpack.c.b16 %v1088, %v1087
        %v1100 = vpack.c.b16 %v1090, %v1089
        %v1101 = vpack.c.b16 %v1092, %v1091
        %v1102 = vpack.c.b16 %v1094, %v1093
        %1111 = vmatpush.bf16.msra.mxu0 %v1102
        %1112 = vmatpush.bf16.msra.mxu0 %v1101
        %1113 = vmatpush.bf16.msra.mxu0 %v1100
        %1114 = vmatpush.bf16.msra.mxu0 %v1099
        %1115 = vmatpush.bf16.msra.mxu0 %v1098
        %1116 = vmatpush.bf16.msra.mxu0 %v1097
        %1117 = vmatpush.bf16.msra.mxu0 %v1096
        %1118 = vmatpush.bf16.msra.mxu0 %v1095
        %1119 = vmatmul.bf16.gmra.mxu0 %v1040
        %v1120 = vpop.f32.mrf.mxu0
        %v1121 = vadd.f32 %v1061, %v1120
        %v1122 = vpop.f32.mrf.mxu0
        %v1123 = vadd.f32 %v1061, %v1122
        %1124 = vdwg.mxu0
        %v1125 = vadd.f32 %v1121, %v951
        %v1126 = vadd.f32 %v1123, %v952
        %v1127 = vpack.c.bf16 %v1126, %v1125
        %s1128 = scalar_lea.vmem [#allocation5], 640
        %v1129 = vld [vmem:[%s1128] sm:$0xf]
        %v1130 = vld [vmem:[%s1128 + $0x4] sm:$0xf]
        %v1131 = vld [vmem:[%s1128 + $0x8] sm:$0xf]
        %v1132 = vld [vmem:[%s1128 + $0xc] sm:$0xf]
        %v1133 = vld [vmem:[%s1128 + $0x10] sm:$0xf]
        %v1134 = vld [vmem:[%s1128 + $0x14] sm:$0xf]
        %v1135 = vld [vmem:[%s1128 + $0x18] sm:$0xf]
        %v1136 = vld [vmem:[%s1128 + $0x1c] sm:$0xf]
        %v1137 = vld [vmem:[%s1128 + $0x20] sm:$0xf]
        %v1138 = vld [vmem:[%s1128 + $0x24] sm:$0xf]
        %v1139 = vld [vmem:[%s1128 + $0x28] sm:$0xf]
        %v1140 = vld [vmem:[%s1128 + $0x2c] sm:$0xf]
        %v1141 = vld [vmem:[%s1128 + $0x30] sm:$0xf]
        %v1142 = vld [vmem:[%s1128 + $0x34] sm:$0xf]
        %v1143 = vld [vmem:[%s1128 + $0x38] sm:$0xf]
        %v1144 = vld [vmem:[%s1128 + $0x3c] sm:$0xf]
        %s1145 = scalar_lea.vmem [#allocation7], 10
        %v1146 = vld [vmem:[%s1145] sm:$0x1]
        %v1148 = vperm.slane %v1146, 0
        %v1166 = vunpack.c.l.b16 %v1129
        %v1167 = vunpack.c.l.b16 %v1130
        %v1168 = vunpack.c.l.b16 %v1131
        %v1169 = vunpack.c.l.b16 %v1132
        %v1170 = vunpack.c.l.b16 %v1133
        %v1171 = vunpack.c.l.b16 %v1134
        %v1172 = vunpack.c.l.b16 %v1135
        %v1173 = vunpack.c.l.b16 %v1136
        %v1174 = vunpack.c.l.b16 %v1137
        %v1175 = vunpack.c.l.b16 %v1138
        %v1176 = vunpack.c.l.b16 %v1139
        %v1177 = vunpack.c.l.b16 %v1140
        %v1178 = vunpack.c.l.b16 %v1141
        %v1179 = vunpack.c.l.b16 %v1142
        %v1180 = vunpack.c.l.b16 %v1143
        %v1181 = vunpack.c.l.b16 %v1144
        %v1182 = vpack.c.b16 %v1167, %v1166
        %v1183 = vpack.c.b16 %v1169, %v1168
        %v1184 = vpack.c.b16 %v1171, %v1170
        %v1185 = vpack.c.b16 %v1173, %v1172
        %v1186 = vpack.c.b16 %v1175, %v1174
        %v1187 = vpack.c.b16 %v1177, %v1176
        %v1188 = vpack.c.b16 %v1179, %v1178
        %v1189 = vpack.c.b16 %v1181, %v1180
        %1198 = vmatpush.bf16.msra.mxu0 %v1189
        %1199 = vmatpush.bf16.msra.mxu0 %v1188
        %1200 = vmatpush.bf16.msra.mxu0 %v1187
        %1201 = vmatpush.bf16.msra.mxu0 %v1186
        %1202 = vmatpush.bf16.msra.mxu0 %v1185
        %1203 = vmatpush.bf16.msra.mxu0 %v1184
        %1204 = vmatpush.bf16.msra.mxu0 %v1183
        %1205 = vmatpush.bf16.msra.mxu0 %v1182
        %1206 = vmatmul.bf16.gmra.mxu0 %v1127
        %v1207 = vpop.f32.mrf.mxu0
        %v1208 = vadd.f32 %v1148, %v1207
        %v1209 = vpop.f32.mrf.mxu0
        %v1210 = vadd.f32 %v1148, %v1209
        %1211 = vdwg.mxu0
        %v1212 = vmax.f32 %v1208, 0.0
        %v1213 = vmax.f32 %v1210, 0.0
        %v1214 = vpack.c.bf16 %v1213, %v1212
        %s1215 = scalar_lea.vmem [#allocation5], 704
        %v1216 = vld [vmem:[%s1215] sm:$0xf]
        %v1217 = vld [vmem:[%s1215 + $0x4] sm:$0xf]
        %v1218 = vld [vmem:[%s1215 + $0x8] sm:$0xf]
        %v1219 = vld [vmem:[%s1215 + $0xc] sm:$0xf]
        %v1220 = vld [vmem:[%s1215 + $0x10] sm:$0xf]
        %v1221 = vld [vmem:[%s1215 + $0x14] sm:$0xf]
        %v1222 = vld [vmem:[%s1215 + $0x18] sm:$0xf]
        %v1223 = vld [vmem:[%s1215 + $0x1c] sm:$0xf]
        %v1224 = vld [vmem:[%s1215 + $0x20] sm:$0xf]
        %v1225 = vld [vmem:[%s1215 + $0x24] sm:$0xf]
        %v1226 = vld [vmem:[%s1215 + $0x28] sm:$0xf]
        %v1227 = vld [vmem:[%s1215 + $0x2c] sm:$0xf]
        %v1228 = vld [vmem:[%s1215 + $0x30] sm:$0xf]
        %v1229 = vld [vmem:[%s1215 + $0x34] sm:$0xf]
        %v1230 = vld [vmem:[%s1215 + $0x38] sm:$0xf]
        %v1231 = vld [vmem:[%s1215 + $0x3c] sm:$0xf]
        %s1232 = scalar_lea.vmem [#allocation7], 11
        %v1233 = vld [vmem:[%s1232] sm:$0x1]
        %v1235 = vperm.slane %v1233, 0
        %v1253 = vunpack.c.l.b16 %v1216
        %v1254 = vunpack.c.l.b16 %v1217
        %v1255 = vunpack.c.l.b16 %v1218
        %v1256 = vunpack.c.l.b16 %v1219
        %v1257 = vunpack.c.l.b16 %v1220
        %v1258 = vunpack.c.l.b16 %v1221
        %v1259 = vunpack.c.l.b16 %v1222
        %v1260 = vunpack.c.l.b16 %v1223
        %v1261 = vunpack.c.l.b16 %v1224
        %v1262 = vunpack.c.l.b16 %v1225
        %v1263 = vunpack.c.l.b16 %v1226
        %v1264 = vunpack.c.l.b16 %v1227
        %v1265 = vunpack.c.l.b16 %v1228
        %v1266 = vunpack.c.l.b16 %v1229
        %v1267 = vunpack.c.l.b16 %v1230
        %v1268 = vunpack.c.l.b16 %v1231
        %v1269 = vpack.c.b16 %v1254, %v1253
        %v1270 = vpack.c.b16 %v1256, %v1255
        %v1271 = vpack.c.b16 %v1258, %v1257
        %v1272 = vpack.c.b16 %v1260, %v1259
        %v1273 = vpack.c.b16 %v1262, %v1261
        %v1274 = vpack.c.b16 %v1264, %v1263
        %v1275 = vpack.c.b16 %v1266, %v1265
        %v1276 = vpack.c.b16 %v1268, %v1267
        %1285 = vmatpush.bf16.msra.mxu0 %v1276
        %1286 = vmatpush.bf16.msra.mxu0 %v1275
        %1287 = vmatpush.bf16.msra.mxu0 %v1274
        %1288 = vmatpush.bf16.msra.mxu0 %v1273
        %1289 = vmatpush.bf16.msra.mxu0 %v1272
        %1290 = vmatpush.bf16.msra.mxu0 %v1271
        %1291 = vmatpush.bf16.msra.mxu0 %v1270
        %1292 = vmatpush.bf16.msra.mxu0 %v1269
        %1293 = vmatmul.bf16.gmra.mxu0 %v1214
        %v1294 = vpop.f32.mrf.mxu0
        %v1295 = vadd.f32 %v1235, %v1294
        %v1296 = vpop.f32.mrf.mxu0
        %v1297 = vadd.f32 %v1235, %v1296
        %1298 = vdwg.mxu0
        %vm1299 = vcmp.lt.s32.totalorder %v427, 16
        %v1300 = vsel %vm1299, %v1208, 0.0
        %v1301 = vsel %vm1299, %v1210, 0.0
        %v1302 = vadd.f32 %v1295, %v1300
        %v1303 = vadd.f32 %v1297, %v1301
        %v1304 = vpack.c.bf16 %v1303, %v1302
        %s1305 = scalar_lea.vmem [#allocation5], 768
        %v1306 = vld [vmem:[%s1305] sm:$0xf]
        %v1307 = vld [vmem:[%s1305 + $0x4] sm:$0xf]
        %v1308 = vld [vmem:[%s1305 + $0x8] sm:$0xf]
        %v1309 = vld [vmem:[%s1305 + $0xc] sm:$0xf]
        %v1310 = vld [vmem:[%s1305 + $0x10] sm:$0xf]
        %v1311 = vld [vmem:[%s1305 + $0x14] sm:$0xf]
        %v1312 = vld [vmem:[%s1305 + $0x18] sm:$0xf]
        %v1313 = vld [vmem:[%s1305 + $0x1c] sm:$0xf]
        %v1314 = vld [vmem:[%s1305 + $0x20] sm:$0xf]
        %v1315 = vld [vmem:[%s1305 + $0x24] sm:$0xf]
        %v1316 = vld [vmem:[%s1305 + $0x28] sm:$0xf]
        %v1317 = vld [vmem:[%s1305 + $0x2c] sm:$0xf]
        %v1318 = vld [vmem:[%s1305 + $0x30] sm:$0xf]
        %v1319 = vld [vmem:[%s1305 + $0x34] sm:$0xf]
        %v1320 = vld [vmem:[%s1305 + $0x38] sm:$0xf]
        %v1321 = vld [vmem:[%s1305 + $0x3c] sm:$0xf]
        %s1322 = scalar_lea.vmem [#allocation7], 12
        %v1323 = vld [vmem:[%s1322] sm:$0x1]
        %v1325 = vperm.slane %v1323, 0
        %v1343 = vunpack.c.l.b16 %v1306
        %v1344 = vunpack.c.l.b16 %v1307
        %v1345 = vunpack.c.l.b16 %v1308
        %v1346 = vunpack.c.l.b16 %v1309
        %v1347 = vunpack.c.l.b16 %v1310
        %v1348 = vunpack.c.l.b16 %v1311
        %v1349 = vunpack.c.l.b16 %v1312
        %v1350 = vunpack.c.l.b16 %v1313
        %v1351 = vunpack.c.l.b16 %v1314
        %v1352 = vunpack.c.l.b16 %v1315
        %v1353 = vunpack.c.l.b16 %v1316
        %v1354 = vunpack.c.l.b16 %v1317
        %v1355 = vunpack.c.l.b16 %v1318
        %v1356 = vunpack.c.l.b16 %v1319
        %v1357 = vunpack.c.l.b16 %v1320
        %v1358 = vunpack.c.l.b16 %v1321
        %v1359 = vpack.c.b16 %v1344, %v1343
        %v1360 = vpack.c.b16 %v1346, %v1345
        %v1361 = vpack.c.b16 %v1348, %v1347
        %v1362 = vpack.c.b16 %v1350, %v1349
        %v1363 = vpack.c.b16 %v1352, %v1351
        %v1364 = vpack.c.b16 %v1354, %v1353
        %v1365 = vpack.c.b16 %v1356, %v1355
        %v1366 = vpack.c.b16 %v1358, %v1357
        %1375 = vmatpush.bf16.msra.mxu0 %v1366
        %1376 = vmatpush.bf16.msra.mxu0 %v1365
        %1377 = vmatpush.bf16.msra.mxu0 %v1364
        %1378 = vmatpush.bf16.msra.mxu0 %v1363
        %1379 = vmatpush.bf16.msra.mxu0 %v1362
        %1380 = vmatpush.bf16.msra.mxu0 %v1361
        %1381 = vmatpush.bf16.msra.mxu0 %v1360
        %1382 = vmatpush.bf16.msra.mxu0 %v1359
        %1383 = vmatmul.bf16.gmra.mxu0 %v1304
        %v1384 = vpop.f32.mrf.mxu0
        %v1385 = vadd.f32 %v1325, %v1384
        %v1386 = vpop.f32.mrf.mxu0
        %v1387 = vadd.f32 %v1325, %v1386
        %1388 = vdwg.mxu0
        %v1389 = vmax.f32 %v1385, 0.0
        %v1390 = vmax.f32 %v1387, 0.0
        %v1391 = vpack.c.bf16 %v1390, %v1389
        %s1392 = scalar_lea.vmem [#allocation5], 832
        %v1393 = vld [vmem:[%s1392] sm:$0xf]
        %v1394 = vld [vmem:[%s1392 + $0x4] sm:$0xf]
        %v1395 = vld [vmem:[%s1392 + $0x8] sm:$0xf]
        %v1396 = vld [vmem:[%s1392 + $0xc] sm:$0xf]
        %v1397 = vld [vmem:[%s1392 + $0x10] sm:$0xf]
        %v1398 = vld [vmem:[%s1392 + $0x14] sm:$0xf]
        %v1399 = vld [vmem:[%s1392 + $0x18] sm:$0xf]
        %v1400 = vld [vmem:[%s1392 + $0x1c] sm:$0xf]
        %v1401 = vld [vmem:[%s1392 + $0x20] sm:$0xf]
        %v1402 = vld [vmem:[%s1392 + $0x24] sm:$0xf]
        %v1403 = vld [vmem:[%s1392 + $0x28] sm:$0xf]
        %v1404 = vld [vmem:[%s1392 + $0x2c] sm:$0xf]
        %v1405 = vld [vmem:[%s1392 + $0x30] sm:$0xf]
        %v1406 = vld [vmem:[%s1392 + $0x34] sm:$0xf]
        %v1407 = vld [vmem:[%s1392 + $0x38] sm:$0xf]
        %v1408 = vld [vmem:[%s1392 + $0x3c] sm:$0xf]
        %s1409 = scalar_lea.vmem [#allocation7], 13
        %v1410 = vld [vmem:[%s1409] sm:$0x1]
        %v1412 = vperm.slane %v1410, 0
        %v1430 = vunpack.c.l.b16 %v1393
        %v1431 = vunpack.c.l.b16 %v1394
        %v1432 = vunpack.c.l.b16 %v1395
        %v1433 = vunpack.c.l.b16 %v1396
        %v1434 = vunpack.c.l.b16 %v1397
        %v1435 = vunpack.c.l.b16 %v1398
        %v1436 = vunpack.c.l.b16 %v1399
        %v1437 = vunpack.c.l.b16 %v1400
        %v1438 = vunpack.c.l.b16 %v1401
        %v1439 = vunpack.c.l.b16 %v1402
        %v1440 = vunpack.c.l.b16 %v1403
        %v1441 = vunpack.c.l.b16 %v1404
        %v1442 = vunpack.c.l.b16 %v1405
        %v1443 = vunpack.c.l.b16 %v1406
        %v1444 = vunpack.c.l.b16 %v1407
        %v1445 = vunpack.c.l.b16 %v1408
        %v1446 = vpack.c.b16 %v1431, %v1430
        %v1447 = vpack.c.b16 %v1433, %v1432
        %v1448 = vpack.c.b16 %v1435, %v1434
        %v1449 = vpack.c.b16 %v1437, %v1436
        %v1450 = vpack.c.b16 %v1439, %v1438
        %v1451 = vpack.c.b16 %v1441, %v1440
        %v1452 = vpack.c.b16 %v1443, %v1442
        %v1453 = vpack.c.b16 %v1445, %v1444
        %1462 = vmatpush.bf16.msra.mxu0 %v1453
        %1463 = vmatpush.bf16.msra.mxu0 %v1452
        %1464 = vmatpush.bf16.msra.mxu0 %v1451
        %1465 = vmatpush.bf16.msra.mxu0 %v1450
        %1466 = vmatpush.bf16.msra.mxu0 %v1449
        %1467 = vmatpush.bf16.msra.mxu0 %v1448
        %1468 = vmatpush.bf16.msra.mxu0 %v1447
        %1469 = vmatpush.bf16.msra.mxu0 %v1446
        %1470 = vmatmul.bf16.gmra.mxu0 %v1391
        %v1471 = vpop.f32.mrf.mxu0
        %v1472 = vadd.f32 %v1412, %v1471
        %v1473 = vpop.f32.mrf.mxu0
        %v1474 = vadd.f32 %v1412, %v1473
        %1475 = vdwg.mxu0
        %v1476 = vadd.f32 %v1472, %v1302
        %v1477 = vadd.f32 %v1474, %v1303
        %v1478 = vpack.c.bf16 %v1476, %v1476
        %v1479 = vpack.c.bf16 %v1477, %v1477
        %1480 = vst [vmem:[%s223] sm:$0xf] %v1478
        %1481 = vst [vmem:[%s223 + $0x4] sm:$0xf] %v1479
        %s1482 = sand.u32 %s97, 1
        %s1483 = scalar_lea.sflag [#allocation4], %s1482
        %s1484 = sand.u32 %s97, 1
        %s1485 = smul.addr %s1484, 8
        %s1486 = scalar_lea.vmem [#allocation8], %s1485
        // Predicated region
        $region45: #{tpu_custom_call.1} parent=31 // pred_check
          %p1487 = pneg %p107
        $region46: #{tpu_custom_call.1} parent=31 // pred_check_branch
          %1489 = sbr.rel (%p1487) target = $region48
        $region47: #{tpu_custom_call.1} parent=31 // pred_region
          %s1490 = smul.u32 2, %s21
          %1492 = vsyncadd %s1483, 0
          %s1493 = smul.addr %s1490, 4
          %s1494 = scalar_lea.hbm %s3, %s1493
          %s1495 = sshll.u32 %s1486, 4
          %s1496 = int_to_ptr.vmem [resolvable:$true] %s1495
          %s1497 = sshll.u32 %s1494, 4
          %s1498 = int_to_ptr.hbm [resolvable:$true] %s1497
          %1503 = dma.vmem_to_hbm [thread:$0]  %s1496, 128, %s1498, %s1483, 64, 64, 4
        $region48: #{tpu_custom_call.1} parent=31 // pred_fallthru
          _
      $region32: #{tpu_custom_call.1} parent=5 // pred_fallthru
        _
      %p1504 = scmp.le.s32.totalorder 2, %s16
      // Predicated region
      $region49: #{tpu_custom_call.1} parent=5 // pred_check
        %p1505 = pneg %p1504
      $region50: #{tpu_custom_call.1} parent=5 // pred_check_branch
        %1507 = sbr.rel (%p1505) target = $region52
      $region51: #{tpu_custom_call.1} parent=5 // pred_region
        %s1508 = ssub.s32 %s16, 2
        // Predicated region
        $region53: #{tpu_custom_call.1} parent=51 // pred_check
          %p1509 = pneg %p113
        $region54: #{tpu_custom_call.1} parent=51 // pred_check_branch
          %1511 = sbr.rel (%p1509) target = $region56
        $region55: #{tpu_custom_call.1} parent=51 // pred_region
          %s1512 = sand.u32 %s98, 1
          %s1513 = scalar_lea.sflag [#allocation4], %s1512
          %s1514 = sand.u32 %s98, 1
          %s1515 = smul.addr %s1514, 8
          %s1516 = scalar_lea.vmem [#allocation8], %s1515
          %1518 = dma.done %s1513, 128
        $region56: #{tpu_custom_call.1} parent=51 // pred_fallthru
          _
      $region52: #{tpu_custom_call.1} parent=5 // pred_fallthru
        _
    $region6: #{tpu_custom_call.1} parent=1 // loop_footer
      %s20 = sadd.s32 1, %s16
    $region7: #{tpu_custom_call.1} parent=1 // loop_footer_branch
      %15 = sbr.rel target = $region3
    $region8: #{tpu_custom_call.1} parent=1 // loop_exit
      _
    %1519 = vsyncpa [#allocation3], 1
    %s1520 = scalar_lea.sflag [#allocation3], 1
    %1521 = vsyncpa %s1520, 1
    %1522 = vsyncpa [#allocation6], 1
    %1523 = vsyncpa [#allocation4], 1
    %s1524 = scalar_lea.sflag [#allocation4], 1
    %1525 = vsyncpa %s1524, 1

</llo_original>
